<compile_context>
chip_gen: v7x
topology: tpu7x:2x2x1
jax: 0.10.0
libtpu: 0.0.40
codegen_flags: <defaults>
</compile_context>

<pallas_src>
import functools

import numpy as np
import jax
import jax.numpy as jnp
from jax.experimental import pallas as pl
from jax.experimental.pallas import tpu as pltpu

NUM_CLASSES = 10
CONV_OC = 2          # conv out channels
KSZ = 4              # conv kernel size
STRIDE = 2           # conv stride
H_IN = 28            # input spatial size (implied by fc in_features=72)
CONV_H = (H_IN - KSZ) // STRIDE + 1   # 13
POOL_H = CONV_H // 2                  # 6 (PyTorch floor mode drops conv row/col 12)
N_POOL = POOL_H * POOL_H              # 36 pooled positions per channel
FC_IN = CONV_OC * N_POOL              # 72
N_PIX = H_IN * H_IN                   # 784

F_PAD = 128          # 72 features and 10 classes both padded to 128 lanes


def _build_structural_tensor():
    """G[pixel, tap, pooled_pos] = 0.25 where `pixel` is conv tap `tap` of a conv
    output position that 2x2/stride-2 average-pools into `pooled_pos`.

    Matches PyTorch semantics: conv 4x4/stride2/valid on 28x28 -> 13x13, then
    AvgPool2d(2,2) -> 6x6 (drops conv row/col 12); flatten order is (C, H, W).
    """
    g = np.zeros((N_PIX, KSZ * KSZ, N_POOL), np.float32)
    for ph in range(POOL_H):
        for pw in range(POOL_H):
            j = ph * POOL_H + pw
            for dh in range(2):
                for dw in range(2):
                    oh, ow = 2 * ph + dh, 2 * pw + dw            # conv output pos
                    for kh in range(KSZ):
                        for kw in range(KSZ):
                            h, w = STRIDE * oh + kh, STRIDE * ow + kw  # input pixel
                            g[h * H_IN + w, kh * KSZ + kw, j] += 0.25
    return g


_G_STRUCT = _build_structural_tensor()   # [784, 16, 36] constant


def _convnet_kernel(x_ref, a_ref, b1_ref, wfc_ref, b2_ref, out_ref, *, compute_dtype):
    # x_ref  : [tb, 784]   raw f32 pixels (rows past B on the boundary tile are
    #                      garbage; their outputs are masked on writeback)
    # a_ref  : [784, 128]  fused conv+avgpool matrix (col = c*36 + ph*6 + pw), compute_dtype
    # b1_ref : [1, 128]    conv bias broadcast over pooled positions, f32
    # wfc_ref: [128, 128]  fc weight transposed (72x10 real, zero padded), compute_dtype
    # b2_ref : [1, 128]    fc bias, f32
    # out_ref: [tb, 128]   logits; columns >= NUM_CLASSES are the inert fc padding
    x = x_ref[...].astype(compute_dtype)          # cast in vregs; no HBM bf16 copy
    feats = jnp.dot(x, a_ref[...], preferred_element_type=jnp.float32) + b1_ref[...]
    r = jnp.maximum(feats, 0.0)                   # bias add / ReLU stay in f32
    out = jnp.dot(r.astype(compute_dtype), wfc_ref[...],
                  preferred_element_type=jnp.float32) + b2_ref[...]
    out_ref[...] = out.astype(out_ref.dtype)


def _round_up(v, m):
    return ((v + m - 1) // m) * m


def _pick_tb(batch):
    """Batch tile: 512 for long grids; 256 for medium batches so the grid has >= 2
    steps (v7x megacore uses both TensorCores); never larger than needed for tiny
    batches.  Always a multiple of 8 (sublane)."""
    if batch <= 256:
        return max(8, _round_up(batch, 8))
    if batch <= 512:
        return 256
    return 512


@functools.partial(jax.jit, static_argnames=("tb", "compute_dtype", "out_dtype"))
def convnet_forward(x, params, *, tb=None, compute_dtype=jnp.bfloat16,
                    out_dtype=jnp.float32):
    """x: [B, 1, 28, 28] float32 (NCHW).  Returns [B, NUM_CLASSES] logits (out_dtype)."""
    B = x.shape[0]
    if tb is None:
        tb = _pick_tb(B)
    n_tiles = pl.cdiv(B, tb)

    # Raw pixels straight from the caller's buffer: free row-major reshape, no cast,
    # no lane/batch padding copy in HBM.
    x_flat = x.reshape(B, N_PIX)

    # Fused conv+pool weight: features[b, c*36+j] = sum_p x[b, p] * A[p, c*36+j].
    wc = params["conv_w"].reshape(CONV_OC, KSZ * KSZ).astype(jnp.float32)
    a = jnp.einsum("pkj,ck->pcj", jnp.asarray(_G_STRUCT), wc,
                   precision=jax.lax.Precision.HIGHEST).reshape(N_PIX, FC_IN)
    a_p = jnp.zeros((N_PIX, F_PAD), compute_dtype).at[:, :FC_IN].set(
        a.astype(compute_dtype))

    # Conv bias (invariant under average pooling) broadcast per channel slab.
    b1 = jnp.zeros((1, F_PAD), jnp.float32).at[0, :FC_IN].set(
        jnp.repeat(params["conv_b"].astype(jnp.float32), N_POOL))
    # fc weight transposed + zero padded; padded rows/cols are zero so padding is inert.
    wfc_p = jnp.zeros((F_PAD, F_PAD), compute_dtype).at[:FC_IN, :NUM_CLASSES].set(
        params["fc_w"].astype(compute_dtype).T)
    b2 = jnp.zeros((1, F_PAD), jnp.float32).at[0, :NUM_CLASSES].set(
        params["fc_b"].astype(jnp.float32))

    # Triple-buffer the streamed pixel tiles only on genuinely long grids.
    if n_tiles >= 8:
        x_spec = pl.BlockSpec((tb, N_PIX), lambda b: (b, 0),
                              pipeline_mode=pl.Buffered(3))
    else:
        x_spec = pl.BlockSpec((tb, N_PIX), lambda b: (b, 0))

    out = pl.pallas_call(
        functools.partial(_convnet_kernel, compute_dtype=compute_dtype),
        out_shape=jax.ShapeDtypeStruct((B, F_PAD), out_dtype),
        grid=(n_tiles,),
        in_specs=[
            x_spec,                                          # streamed batch tile
            pl.BlockSpec((N_PIX, F_PAD), lambda b: (0, 0)),  # resident weights
            pl.BlockSpec((1, F_PAD), lambda b: (0, 0)),
            pl.BlockSpec((F_PAD, F_PAD), lambda b: (0, 0)),
            pl.BlockSpec((1, F_PAD), lambda b: (0, 0)),
        ],
        out_specs=pl.BlockSpec((tb, F_PAD), lambda b: (b, 0)),
        compiler_params=pltpu.CompilerParams(
            dimension_semantics=("parallel",)),
    )(x_flat, a_p, b1, wfc_p, b2)
    return out[:, :NUM_CLASSES]


def reference_forward(x, params):
    """Pure-JAX reference matching the PyTorch forward."""
    conv = jax.lax.conv_general_dilated(
        x, params["conv_w"], window_strides=(STRIDE, STRIDE), padding="VALID",
        dimension_numbers=("NCHW", "OIHW", "NCHW"),
        precision=jax.lax.Precision.HIGHEST)
    conv = conv + params["conv_b"].reshape(1, CONV_OC, 1, 1)
    pooled = jax.lax.reduce_window(conv, 0.0, jax.lax.add,
                                   (1, 1, 2, 2), (1, 1, 2, 2), "VALID") / 4.0
    flat = pooled.reshape(x.shape[0], -1)              # (C, H, W) flatten order
    r = jnp.maximum(flat, 0.0)
    return jnp.dot(r, params["fc_w"].T,
                   precision=jax.lax.Precision.HIGHEST) + params["fc_b"]


if __name__ == "__main__":
    key = jax.random.PRNGKey(0)
    k1, k2, k3, k4, k5, k6 = jax.random.split(key, 6)
    # Deterministic synthetic init (module does randn * std per parameter).
    params = {
        "conv_w": jax.random.normal(k1, (CONV_OC, 1, KSZ, KSZ), jnp.float32) * 0.1,
        "conv_b": jax.random.normal(k2, (CONV_OC,), jnp.float32) * 0.1,
        "fc_w":   jax.random.normal(k3, (NUM_CLASSES, FC_IN), jnp.float32) * 0.1,
        "fc_b":   jax.random.normal(k4, (NUM_CLASSES,), jnp.float32) * 0.1,
    }

    # Medium batch: 2-tile grid (256 + masked remainder of 8) -> exercises the
    # multi-step pipeline, the megacore split and the boundary-block masking.
    B1 = 264
    x1 = jax.random.normal(k5, (B1, 1, H_IN, H_IN), jnp.float32)  # NCHW, MNIST-sized
    ref1 = jax.block_until_ready(reference_forward(x1, params))

    # Full-f32 path: tight structural / ordering check.
    out_f32 = jax.block_until_ready(
        convnet_forward(x1, params, compute_dtype=jnp.float32))
    assert out_f32.shape == (B1, NUM_CLASSES)
    np.testing.assert_allclose(np.asarray(out_f32), np.asarray(ref1),
                               rtol=2e-4, atol=2e-4)

    # Default bf16 compute path (f32 accumulation on both matmuls).
    out_bf16 = jax.block_until_ready(convnet_forward(x1, params))
    assert out_bf16.shape == (B1, NUM_CLASSES)
    np.testing.assert_allclose(np.asarray(out_bf16), np.asarray(ref1),
                               rtol=3e-2, atol=3e-2)

    # Tiny batch: single exact tile (tb == B) -> exercises the small-batch path.
    B2 = 40
    x2 = jax.random.normal(k6, (B2, 1, H_IN, H_IN), jnp.float32)
    ref2 = jax.block_until_ready(reference_forward(x2, params))
    out_small = jax.block_until_ready(convnet_forward(x2, params))
    assert out_small.shape == (B2, NUM_CLASSES)
    np.testing.assert_allclose(np.asarray(out_small), np.asarray(ref2),
                               rtol=3e-2, atol=3e-2)

    print("KERNEL_OK")
</pallas_src>

<mosaic_0001>
module attributes {stable_mosaic.version = 11 : i64} {
  func.func @_convnet_kernel(%arg0: i32, %arg1: memref<256x784xf32, #tpu.memory_space<vmem>>, %arg2: memref<784x128xf32, #tpu.memory_space<vmem>>, %arg3: memref<1x128xf32, #tpu.memory_space<vmem>>, %arg4: memref<128x128xf32, #tpu.memory_space<vmem>>, %arg5: memref<1x128xf32, #tpu.memory_space<vmem>>, %arg6: memref<256x128xf32, #tpu.memory_space<vmem>>) attributes {dimension_semantics = [#tpu.dimension_semantics<parallel>], iteration_bounds = array<i64: 2>, scalar_prefetch = 0 : i64, scratch_operands = 0 : i64, tpu.core_type = #tpu.core_type<tc>, window_params = [{transform_indices = @transform_0, window_bounds = array<i64: 256, 784>}, {pipeline_mode = #tpu.pipeline_mode<synchronous>, transform_indices = @transform_1, window_bounds = array<i64: 784, 128>}, {pipeline_mode = #tpu.pipeline_mode<synchronous>, transform_indices = @transform_2, window_bounds = array<i64: 1, 128>}, {pipeline_mode = #tpu.pipeline_mode<synchronous>, transform_indices = @transform_3, window_bounds = array<i64: 128, 128>}, {pipeline_mode = #tpu.pipeline_mode<synchronous>, transform_indices = @transform_4, window_bounds = array<i64: 1, 128>}, {transform_indices = @transform_5, window_bounds = array<i64: 256, 128>}]} {
    %c0 = arith.constant 0 : index
    %c0_0 = arith.constant 0 : index
    %0 = vector.load %arg1[%c0, %c0_0] : memref<256x784xf32, #tpu.memory_space<vmem>>, vector<256x784xf32>
    %c0_1 = arith.constant 0 : index
    %c0_2 = arith.constant 0 : index
    %1 = vector.load %arg2[%c0_1, %c0_2] : memref<784x128xf32, #tpu.memory_space<vmem>>, vector<784x128xf32>
    %cst = arith.constant dense<0.000000e+00> : vector<256x128xf32>
    %2 = tpu.matmul %0, %1, %cst {dimension_numbers = #tpu.dot_dimension_numbers<[1], [0], [0], [1], [0, 0, 1, 1], [], []>} : vector<256x784xf32>, vector<784x128xf32>, vector<256x128xf32> -> vector<256x128xf32>
    %c0_3 = arith.constant 0 : index
    %c0_4 = arith.constant 0 : index
    %3 = vector.load %arg3[%c0_3, %c0_4] : memref<1x128xf32, #tpu.memory_space<vmem>>, vector<1x128xf32>
    %4 = vector.broadcast %3 : vector<1x128xf32> to vector<256x128xf32>
    %5 = arith.addf %2, %4 : vector<256x128xf32>
    %cst_5 = arith.constant 0.000000e+00 : f32
    %6 = vector.broadcast %cst_5 : f32 to vector<256x128xf32>
    %7 = arith.maximumf %5, %6 : vector<256x128xf32>
    %c0_6 = arith.constant 0 : index
    %c0_7 = arith.constant 0 : index
    %8 = vector.load %arg4[%c0_6, %c0_7] : memref<128x128xf32, #tpu.memory_space<vmem>>, vector<128x128xf32>
    %cst_8 = arith.constant dense<0.000000e+00> : vector<256x128xf32>
    %9 = tpu.matmul %7, %8, %cst_8 {dimension_numbers = #tpu.dot_dimension_numbers<[1], [0], [0], [1], [0, 0, 1, 1], [], []>} : vector<256x128xf32>, vector<128x128xf32>, vector<256x128xf32> -> vector<256x128xf32>
    %c0_9 = arith.constant 0 : index
    %c0_10 = arith.constant 0 : index
    %10 = vector.load %arg5[%c0_9, %c0_10] : memref<1x128xf32, #tpu.memory_space<vmem>>, vector<1x128xf32>
    %11 = vector.broadcast %10 : vector<1x128xf32> to vector<256x128xf32>
    %12 = arith.addf %9, %11 : vector<256x128xf32>
    %c0_11 = arith.constant 0 : index
    %c0_12 = arith.constant 0 : index
    %13 = vector.load %arg6[%c0_11, %c0_12] : memref<256x128xf32, #tpu.memory_space<vmem>>, vector<256x128xf32>
    tpu.vector_store %arg6[%c0_11, %c0_12], %12 {strides = array<i32>} : memref<256x128xf32, #tpu.memory_space<vmem>>, vector<256x128xf32>,
    return
  }
  func.func @transform_0(%arg0: i32) -> (i32, i32) {
    %c0_i32 = arith.constant 0 : i32
    %c0_i32_0 = arith.constant 0 : i32
    return %arg0, %c0_i32 : i32, i32
  }
  func.func @transform_1(%arg0: i32) -> (i32, i32) {
    %c0_i32 = arith.constant 0 : i32
    %c0_i32_0 = arith.constant 0 : i32
    %c0_i32_1 = arith.constant 0 : i32
    return %c0_i32, %c0_i32_0 : i32, i32
  }
  func.func @transform_2(%arg0: i32) -> (i32, i32) {
    %c0_i32 = arith.constant 0 : i32
    %c0_i32_0 = arith.constant 0 : i32
    %c0_i32_1 = arith.constant 0 : i32
    return %c0_i32, %c0_i32_0 : i32, i32
  }
  func.func @transform_3(%arg0: i32) -> (i32, i32) {
    %c0_i32 = arith.constant 0 : i32
    %c0_i32_0 = arith.constant 0 : i32
    %c0_i32_1 = arith.constant 0 : i32
    return %c0_i32, %c0_i32_0 : i32, i32
  }
  func.func @transform_4(%arg0: i32) -> (i32, i32) {
    %c0_i32 = arith.constant 0 : i32
    %c0_i32_0 = arith.constant 0 : i32
    %c0_i32_1 = arith.constant 0 : i32
    return %c0_i32, %c0_i32_0 : i32, i32
  }
  func.func @transform_5(%arg0: i32) -> (i32, i32) {
    %c0_i32 = arith.constant 0 : i32
    %c0_i32_0 = arith.constant 0 : i32
    return %arg0, %c0_i32 : i32, i32
  }
}

</mosaic_0001>

<llo_original>
// kernel: convnet_forward.1
$region0: #{convnet_forward.1}
  #allocation0 [shape = 'u32[]', space=smem, size = 0x4, offset = 0x4, fixed_abs, tag = 'smem constant byte address 0x4 - core index']
  #allocation1 [shape = 'u32[144,128]{1,0:T(1,128)}', space=vmem, size = 0x12000, scoped, tag = 'internal scratch']
  %s0 = inlined_call_operand.vmem [shape: f32[264,784], index: 0, kind: input, shape index: {}]
  %s1 = inlined_call_operand.vmem [shape: f32[784,128], index: 1, kind: input, shape index: {}]
  %s2 = inlined_call_operand.vmem [shape: f32[1,128], index: 2, kind: input, shape index: {}]
  %s3 = inlined_call_operand.vmem [shape: f32[128,128], index: 3, kind: input, shape index: {}]
  %s4 = inlined_call_operand.vmem [shape: f32[1,128], index: 4, kind: input, shape index: {}]
  %s5 = inlined_call_operand.vmem [shape: f32[264,128], index: 5, kind: output, shape index: {}]
  %s6 = sld [smem:[#allocation0]]
  $region101: #{convnet_forward.1} parent=0
    _
  %s8 = ssub.s32 1, %s6
  %s9 = scalar_select 0, %s8, %s6
  $region1: #{convnet_forward.1} parent=0
    #allocation2 [shape = 'u8[262144]{0}', space=vmem, size = 0x40000, scoped, tag = 'output window, operand 0']
    loop: start=0, step=1, limit=4
    $region2: #{convnet_forward.1} parent=1 // loop_pre_header
      _
    $region3: #{convnet_forward.1} parent=1 // loop_header
      %s11 = sphi 0, %s15
      %p12 = scmp.ge.s32.totalorder %s11, 4
      %s21 = sphi 0, %s23
      %s24 = sphi 0, %s21
      %s25 = sphi 0, %s24
      %s41 = sphi 0, %s25
      %s45 = sphi 0, %s45
      %s47 = sphi 0, %s45
      %s48 = sphi 0, %s47
      %s62 = sphi 0, %s48
      %s66 = sphi 0, %s66
      %s68 = sphi 0, %s66
      %s69 = sphi 0, %s68
      %s83 = sphi 0, %s69
      %s87 = sphi 0, %s87
      %s89 = sphi 0, %s87
      %s90 = sphi 0, %s89
      %s104 = sphi 0, %s90
      %s108 = sphi 0, %s108
      %s110 = sphi 0, %s108
      %s111 = sphi 0, %s110
      %s125 = sphi 0, %s111
      %s131 = sphi 0, %s133
      %s134 = sphi 0, %s131
      %s135 = sphi 0, %s134
      %s151 = sphi 0, %s135
    $region4: #{convnet_forward.1} parent=1 // loop_header_branch
      %14 = sbr.rel (%p12) target = $region8
    $region5: #{convnet_forward.1} parent=1 // loop_body
      %s16 = ssub.s32 %s11, 1
      %s17 = ssub.s32 %s11, 2
      %s18 = sadd.s32 %s11, 1
      %s19 = ssub.s32 %s11, %s18
      %p20 = scmp.eq.s32.totalorder %s19, 0
      %s22 = sadd.s32 %s21, 1
      %s23 = scalar_select %p20, %s21, %s22
      %p26 = pneg %p20
      %p27 = scmp.eq.s32.totalorder %s11, 1
      %p28 = por %p26, %p27
      %p29 = scmp.ne.s32.totalorder %s21, %s24
      %p30 = scmp.eq.s32.totalorder %s11, 0
      %p31 = por %p29, %p30
      %p32 = scmp.ne.s32.totalorder %s21, %s24
      %p33 = scmp.eq.s32.totalorder %s16, 1
      %p34 = por %p32, %p33
      %p35 = scmp.ne.s32.totalorder %s24, %s25
      %p36 = scmp.eq.s32.totalorder %s16, 0
      %p37 = por %p35, %p36
      %p38 = scmp.ne.s32.totalorder %s24, %s25
      %p39 = scmp.eq.s32.totalorder %s17, 1
      %p40 = por %p38, %p39
      %p42 = scmp.ne.s32.totalorder %s25, %s41
      %p43 = scmp.eq.s32.totalorder %s17, 0
      %p44 = por %p42, %p43
      %s46 = sadd.s32 %s45, 1
      %p49 = scmp.eq.s32.totalorder %s11, 1
      %p50 = scmp.ne.s32.totalorder %s45, %s47
      %p51 = scmp.eq.s32.totalorder %s11, 0
      %p52 = por %p50, %p51
      %p53 = scmp.ne.s32.totalorder %s45, %s47
      %p54 = scmp.eq.s32.totalorder %s16, 1
      %p55 = por %p53, %p54
      %p56 = scmp.ne.s32.totalorder %s47, %s48
      %p57 = scmp.eq.s32.totalorder %s16, 0
      %p58 = por %p56, %p57
      %p59 = scmp.ne.s32.totalorder %s47, %s48
      %p60 = scmp.eq.s32.totalorder %s17, 1
      %p61 = por %p59, %p60
      %p63 = scmp.ne.s32.totalorder %s48, %s62
      %p64 = scmp.eq.s32.totalorder %s17, 0
      %p65 = por %p63, %p64
      %s67 = sadd.s32 %s66, 1
      %p70 = scmp.eq.s32.totalorder %s11, 1
      %p71 = scmp.ne.s32.totalorder %s66, %s68
      %p72 = scmp.eq.s32.totalorder %s11, 0
      %p73 = por %p71, %p72
      %p74 = scmp.ne.s32.totalorder %s66, %s68
      %p75 = scmp.eq.s32.totalorder %s16, 1
      %p76 = por %p74, %p75
      %p77 = scmp.ne.s32.totalorder %s68, %s69
      %p78 = scmp.eq.s32.totalorder %s16, 0
      %p79 = por %p77, %p78
      %p80 = scmp.ne.s32.totalorder %s68, %s69
      %p81 = scmp.eq.s32.totalorder %s17, 1
      %p82 = por %p80, %p81
      %p84 = scmp.ne.s32.totalorder %s69, %s83
      %p85 = scmp.eq.s32.totalorder %s17, 0
      %p86 = por %p84, %p85
      %s88 = sadd.s32 %s87, 1
      %p91 = scmp.eq.s32.totalorder %s11, 1
      %p92 = scmp.ne.s32.totalorder %s87, %s89
      %p93 = scmp.eq.s32.totalorder %s11, 0
      %p94 = por %p92, %p93
      %p95 = scmp.ne.s32.totalorder %s87, %s89
      %p96 = scmp.eq.s32.totalorder %s16, 1
      %p97 = por %p95, %p96
      %p98 = scmp.ne.s32.totalorder %s89, %s90
      %p99 = scmp.eq.s32.totalorder %s16, 0
      %p100 = por %p98, %p99
      %p101 = scmp.ne.s32.totalorder %s89, %s90
      %p102 = scmp.eq.s32.totalorder %s17, 1
      %p103 = por %p101, %p102
      %p105 = scmp.ne.s32.totalorder %s90, %s104
      %p106 = scmp.eq.s32.totalorder %s17, 0
      %p107 = por %p105, %p106
      %s109 = sadd.s32 %s108, 1
      %p112 = scmp.eq.s32.totalorder %s11, 1
      %p113 = scmp.ne.s32.totalorder %s108, %s110
      %p114 = scmp.eq.s32.totalorder %s11, 0
      %p115 = por %p113, %p114
      %p116 = scmp.ne.s32.totalorder %s108, %s110
      %p117 = scmp.eq.s32.totalorder %s16, 1
      %p118 = por %p116, %p117
      %p119 = scmp.ne.s32.totalorder %s110, %s111
      %p120 = scmp.eq.s32.totalorder %s16, 0
      %p121 = por %p119, %p120
      %p122 = scmp.ne.s32.totalorder %s110, %s111
      %p123 = scmp.eq.s32.totalorder %s17, 1
      %p124 = por %p122, %p123
      %p126 = scmp.ne.s32.totalorder %s111, %s125
      %p127 = scmp.eq.s32.totalorder %s17, 0
      %p128 = por %p126, %p127
      %s129 = ssub.s32 %s11, %s18
      %p130 = scmp.eq.s32.totalorder %s129, 0
      %s132 = sadd.s32 %s131, 1
      %s133 = scalar_select %p130, %s131, %s132
      %p136 = pneg %p130
      %p137 = scmp.eq.s32.totalorder %s11, 1
      %p138 = por %p136, %p137
      %p139 = scmp.ne.s32.totalorder %s131, %s134
      %p140 = scmp.eq.s32.totalorder %s11, 0
      %p141 = por %p139, %p140
      %p142 = scmp.ne.s32.totalorder %s131, %s134
      %p143 = scmp.eq.s32.totalorder %s16, 1
      %p144 = por %p142, %p143
      %p145 = scmp.ne.s32.totalorder %s134, %s135
      %p146 = scmp.eq.s32.totalorder %s16, 0
      %p147 = por %p145, %p146
      %p148 = scmp.ne.s32.totalorder %s134, %s135
      %p149 = scmp.eq.s32.totalorder %s17, 1
      %p150 = por %p148, %p149
      %p152 = scmp.ne.s32.totalorder %s135, %s151
      %p153 = scmp.eq.s32.totalorder %s17, 0
      %p154 = por %p152, %p153
      %p155 = scmp.le.s32.totalorder 1, %s11
      %p156 = scmp.lt.s32.totalorder %s11, 3
      %p157 = pnand %p155, %p156
      %p158 = pneg %p157
      // Predicated region
      $region9: #{convnet_forward.1} parent=5 // pred_check
        _
      $region10: #{convnet_forward.1} parent=5 // pred_check_branch
        %160 = sbr.rel (%p157) target = $region12
      $region11: #{convnet_forward.1} parent=5 // pred_region
        %s161 = ssub.s32 %s11, 1
        // Predicated region
        $region13: #{convnet_forward.1} parent=11 // pred_check
          %p162 = pneg %p58
        $region14: #{convnet_forward.1} parent=11 // pred_check_branch
          %164 = sbr.rel (%p162) target = $region16
        $region15: #{convnet_forward.1} parent=11 // pred_region
          _
        $region16: #{convnet_forward.1} parent=11 // pred_fallthru
          _
        // Predicated region
        $region17: #{convnet_forward.1} parent=11 // pred_check
          %p165 = pneg %p79
        $region18: #{convnet_forward.1} parent=11 // pred_check_branch
          %167 = sbr.rel (%p165) target = $region20
        $region19: #{convnet_forward.1} parent=11 // pred_region
          _
        $region20: #{convnet_forward.1} parent=11 // pred_fallthru
          _
        // Predicated region
        $region21: #{convnet_forward.1} parent=11 // pred_check
          %p168 = pneg %p100
        $region22: #{convnet_forward.1} parent=11 // pred_check_branch
          %170 = sbr.rel (%p168) target = $region24
        $region23: #{convnet_forward.1} parent=11 // pred_region
          _
        $region24: #{convnet_forward.1} parent=11 // pred_fallthru
          _
        // Predicated region
        $region25: #{convnet_forward.1} parent=11 // pred_check
          %p171 = pneg %p121
        $region26: #{convnet_forward.1} parent=11 // pred_check_branch
          %173 = sbr.rel (%p171) target = $region28
        $region27: #{convnet_forward.1} parent=11 // pred_region
          _
        $region28: #{convnet_forward.1} parent=11 // pred_fallthru
          _
      $region12: #{convnet_forward.1} parent=5 // pred_fallthru
        _
      %p174 = scmp.lt.s32.totalorder %s11, 2
      // Predicated region
      $region29: #{convnet_forward.1} parent=5 // pred_check
        %p175 = pneg %p174
      $region30: #{convnet_forward.1} parent=5 // pred_check_branch
        %177 = sbr.rel (%p175) target = $region32
      $region31: #{convnet_forward.1} parent=5 // pred_region
        // Predicated region
        $region33: #{convnet_forward.1} parent=31 // pred_check
          %p178 = pneg %p31
        $region34: #{convnet_forward.1} parent=31 // pred_check_branch
          %180 = sbr.rel (%p178) target = $region36
        $region35: #{convnet_forward.1} parent=31 // pred_region
          %s181 = smul.u32 32, %s11
          %s182 = ssub.s32 33, %s181
          %p183 = scmp.lt.s32.totalorder %s182, 32
          %s184 = scalar_select %p183, %s182, 32
          %s185 = smul.u32 128, %s184
          %s186 = smul.u32 %s185, 7
          %p187 = scmp.lt.s32.totalorder %s181, 32
          %s188 = scalar_select %p187, %s181, 32
          %s189 = smul.addr %s188, 7
          %s190 = smul.addr %s189, 8
          %s191 = scalar_lea.vmem %s0, %s190
          %s192 = smul.u32 32, %s11
          %s193 = ssub.s32 33, %s192
          %p194 = scmp.lt.s32.totalorder %s193, 32
          %s195 = scalar_select %p194, %s193, 32
          %s196 = smul.u32 128, %s195
          %s197 = smul.u32 %s196, 7
        $region36: #{convnet_forward.1} parent=31 // pred_fallthru
          _
      $region32: #{convnet_forward.1} parent=5 // pred_fallthru
        _
      %p198 = scmp.le.s32.totalorder 1, %s11
      %p199 = scmp.lt.s32.totalorder %s11, 3
      %p200 = pnand %p198, %p199
      %p201 = pneg %p200
      // Predicated region
      $region37: #{convnet_forward.1} parent=5 // pred_check
        _
      $region38: #{convnet_forward.1} parent=5 // pred_check_branch
        %203 = sbr.rel (%p200) target = $region40
      $region39: #{convnet_forward.1} parent=5 // pred_region
        %s204 = ssub.s32 %s11, 1
        %s205 = smul.u32 32, %s16
        %s206 = ssub.s32 33, %s205
        %p207 = scmp.lt.s32.totalorder %s206, 32
        %s208 = scalar_select %p207, %s206, 32
        %s209 = smul.u32 128, %s208
        %s210 = smul.u32 %s209, 7
        %p211 = scmp.lt.s32.totalorder %s205, 32
        %s212 = scalar_select %p211, %s205, 32
        %s213 = smul.addr %s212, 7
        %s214 = smul.addr %s213, 8
        %s215 = scalar_lea.vmem %s0, %s214
        %p216 = pneg %p37
        %p217 = pneg %p34
        %p218 = pneg %p58
        %p219 = pneg %p55
        %p220 = pneg %p79
        %p221 = pneg %p76
        %p222 = pneg %p100
        %p223 = pneg %p97
        %p224 = pneg %p121
        %p225 = pneg %p118
        %p226 = pneg %p147
        %p227 = pneg %p144
        %s228 = sand.u32 %s134, 1
        %s229 = sand.u32 %s134, 1
        %s230 = smul.addr %s229, 256
        %s231 = scalar_lea.vmem [#allocation2], %s230
        %s232 = smul.u32 32, %s16
        %s233 = ssub.s32 33, %s232
        %p234 = scmp.lt.s32.totalorder %s233, 32
        %s235 = scalar_select %p234, %s233, 32
        %s236 = smul.u32 128, %s235
        %s237 = smul.u32 %s236, 7
        %p238 = scmp.lt.s32.totalorder %s232, 32
        %s239 = scalar_select %p238, %s232, 32
        %s240 = smul.addr %s239, 7
        %s241 = smul.addr %s240, 8
        %s242 = scalar_lea.vmem %s0, %s241
        %s243 = smul.u32 32, %s16
        %s244 = ssub.s32 33, %s243
        %p245 = scmp.lt.s32.totalorder %s244, 32
        %s246 = scalar_select %p245, %s244, 32
        %s247 = smul.u32 128, %s246
        %s248 = smul.u32 %s247, 7
        %s249 = smul.u32 32, %s16
        %s250 = ssub.s32 33, %s249
        %p251 = scmp.lt.s32.totalorder %s250, 32
        %s252 = scalar_select %p251, %s250, 32
        %s253 = smul.u32 128, %s252
        %v254 = vld [vmem:[%s242] sm:$0xff]
        %v255 = vld [vmem:[%s242 + $0x8] sm:$0xff]
        %v256 = vld [vmem:[%s242 + $0x10] sm:$0xff]
        %v257 = vld [vmem:[%s242 + $0x18] sm:$0xff]
        %v258 = vld [vmem:[%s242 + $0x20] sm:$0xff]
        %v259 = vld [vmem:[%s242 + $0x28] sm:$0xff]
        %v260 = vld [vmem:[%s242 + $0x30] sm:$0xff]
        %v261 = vld [vmem:[%s242 + $0x38] sm:$0xff]
        %v262 = vld [vmem:[%s242 + $0x40] sm:$0xff]
        %v263 = vld [vmem:[%s242 + $0x48] sm:$0xff]
        %v264 = vld [vmem:[%s242 + $0x50] sm:$0xff]
        %v265 = vld [vmem:[%s242 + $0x58] sm:$0xff]
        %v266 = vld [vmem:[%s242 + $0x60] sm:$0xff]
        %v267 = vld [vmem:[%s242 + $0x68] sm:$0xff]
        %v268 = vld [vmem:[%s242 + $0x70] sm:$0xff]
        %v269 = vld [vmem:[%s242 + $0x78] sm:$0xff]
        %v270 = vld [vmem:[%s242 + $0x80] sm:$0xff]
        %v271 = vld [vmem:[%s242 + $0x88] sm:$0xff]
        %v272 = vld [vmem:[%s242 + $0x90] sm:$0xff]
        %v273 = vld [vmem:[%s242 + $0x98] sm:$0xff]
        %v274 = vld [vmem:[%s242 + $0xa0] sm:$0xff]
        %v275 = vld [vmem:[%s242 + $0xa8] sm:$0xff]
        %v276 = vld [vmem:[%s242 + $0xb0] sm:$0xff]
        %v277 = vld [vmem:[%s242 + $0xb8] sm:$0xff]
        %v278 = vld [vmem:[%s242 + $0xc0] sm:$0xff]
        %v279 = vld [vmem:[%s242 + $0xc8] sm:$0xff]
        %v280 = vld [vmem:[%s242 + $0xd0] sm:$0xff]
        %v281 = vld [vmem:[%s242 + $0xd8] sm:$0xff]
        %v282 = vld [vmem:[%s242 + $0xe0] sm:$0xff]
        %v283 = vld [vmem:[%s242 + $0xe8] sm:$0xff]
        %v284 = vld [vmem:[%s242 + $0xf0] sm:$0xff]
        %v285 = vld [vmem:[%s242 + $0xf8] sm:$0xff]
        %v286 = vld [vmem:[%s242 + $0x100] sm:$0xff]
        %v287 = vld [vmem:[%s242 + $0x108] sm:$0xff]
        %v288 = vld [vmem:[%s242 + $0x110] sm:$0xff]
        %v289 = vld [vmem:[%s242 + $0x118] sm:$0xff]
        %v290 = vld [vmem:[%s242 + $0x120] sm:$0xff]
        %v291 = vld [vmem:[%s242 + $0x128] sm:$0xff]
        %v292 = vld [vmem:[%s242 + $0x130] sm:$0xff]
        %v293 = vld [vmem:[%s242 + $0x138] sm:$0xff]
        %v294 = vld [vmem:[%s242 + $0x140] sm:$0xff]
        %v295 = vld [vmem:[%s242 + $0x148] sm:$0xff]
        %v296 = vld [vmem:[%s242 + $0x150] sm:$0xff]
        %v297 = vld [vmem:[%s242 + $0x158] sm:$0xff]
        %v298 = vld [vmem:[%s242 + $0x160] sm:$0xff]
        %v299 = vld [vmem:[%s242 + $0x168] sm:$0xff]
        %v300 = vld [vmem:[%s242 + $0x170] sm:$0xff]
        %v301 = vld [vmem:[%s242 + $0x178] sm:$0xff]
        %v302 = vld [vmem:[%s242 + $0x180] sm:$0xff]
        %v303 = vld [vmem:[%s242 + $0x188] sm:$0xff]
        %v304 = vld [vmem:[%s242 + $0x190] sm:$0xff]
        %v305 = vld [vmem:[%s242 + $0x198] sm:$0xff]
        %v306 = vld [vmem:[%s242 + $0x1a0] sm:$0xff]
        %v307 = vld [vmem:[%s242 + $0x1a8] sm:$0xff]
        %v308 = vld [vmem:[%s242 + $0x1b0] sm:$0xff]
        %v309 = vld [vmem:[%s242 + $0x1b8] sm:$0xff]
        %v310 = vld [vmem:[%s242 + $0x1c0] sm:$0xff]
        %v311 = vld [vmem:[%s242 + $0x1c8] sm:$0xff]
        %v312 = vld [vmem:[%s242 + $0x1d0] sm:$0xff]
        %v313 = vld [vmem:[%s242 + $0x1d8] sm:$0xff]
        %v314 = vld [vmem:[%s242 + $0x1e0] sm:$0xff]
        %v315 = vld [vmem:[%s242 + $0x1e8] sm:$0xff]
        %v316 = vld [vmem:[%s242 + $0x1f0] sm:$0xff]
        %v317 = vld [vmem:[%s242 + $0x1f8] sm:$0xff]
        %v318 = vld [vmem:[%s242 + $0x200] sm:$0xff]
        %v319 = vld [vmem:[%s242 + $0x208] sm:$0xff]
        %v320 = vld [vmem:[%s242 + $0x210] sm:$0xff]
        %v321 = vld [vmem:[%s242 + $0x218] sm:$0xff]
        %v322 = vld [vmem:[%s242 + $0x220] sm:$0xff]
        %v323 = vld [vmem:[%s242 + $0x228] sm:$0xff]
        %v324 = vld [vmem:[%s242 + $0x230] sm:$0xff]
        %v325 = vld [vmem:[%s242 + $0x238] sm:$0xff]
        %v326 = vld [vmem:[%s242 + $0x240] sm:$0xff]
        %v327 = vld [vmem:[%s242 + $0x248] sm:$0xff]
        %v328 = vld [vmem:[%s242 + $0x250] sm:$0xff]
        %v329 = vld [vmem:[%s242 + $0x258] sm:$0xff]
        %v330 = vld [vmem:[%s242 + $0x260] sm:$0xff]
        %v331 = vld [vmem:[%s242 + $0x268] sm:$0xff]
        %v332 = vld [vmem:[%s242 + $0x270] sm:$0xff]
        %v333 = vld [vmem:[%s242 + $0x278] sm:$0xff]
        %v334 = vld [vmem:[%s242 + $0x280] sm:$0xff]
        %v335 = vld [vmem:[%s242 + $0x288] sm:$0xff]
        %v336 = vld [vmem:[%s242 + $0x290] sm:$0xff]
        %v337 = vld [vmem:[%s242 + $0x298] sm:$0xff]
        %v338 = vld [vmem:[%s242 + $0x2a0] sm:$0xff]
        %v339 = vld [vmem:[%s242 + $0x2a8] sm:$0xff]
        %v340 = vld [vmem:[%s242 + $0x2b0] sm:$0xff]
        %v341 = vld [vmem:[%s242 + $0x2b8] sm:$0xff]
        %v342 = vld [vmem:[%s242 + $0x2c0] sm:$0xff]
        %v343 = vld [vmem:[%s242 + $0x2c8] sm:$0xff]
        %v344 = vld [vmem:[%s242 + $0x2d0] sm:$0xff]
        %v345 = vld [vmem:[%s242 + $0x2d8] sm:$0xff]
        %v346 = vld [vmem:[%s242 + $0x2e0] sm:$0xff]
        %v347 = vld [vmem:[%s242 + $0x2e8] sm:$0xff]
        %v348 = vld [vmem:[%s242 + $0x2f0] sm:$0xff]
        %v349 = vld [vmem:[%s242 + $0x2f8] sm:$0xff]
        %v350 = vld [vmem:[%s242 + $0x300] sm:$0xff]
        %v351 = vld [vmem:[%s242 + $0x308] sm:$0xff]
        %v352 = vld [vmem:[%s242 + $0x310] sm:$0xff]
        %v353 = vld [vmem:[%s242 + $0x318] sm:$0xff]
        %v354 = vld [vmem:[%s242 + $0x320] sm:$0xff]
        %v355 = vld [vmem:[%s242 + $0x328] sm:$0xff]
        %v356 = vld [vmem:[%s242 + $0x330] sm:$0xff]
        %v357 = vld [vmem:[%s242 + $0x338] sm:$0xff]
        %v358 = vld [vmem:[%s242 + $0x340] sm:$0xff]
        %v359 = vld [vmem:[%s242 + $0x348] sm:$0xff]
        %v360 = vld [vmem:[%s242 + $0x350] sm:$0xff]
        %v361 = vld [vmem:[%s242 + $0x358] sm:$0xff]
        %v362 = vld [vmem:[%s242 + $0x360] sm:$0xff]
        %v363 = vld [vmem:[%s242 + $0x368] sm:$0xff]
        %v364 = vld [vmem:[%s242 + $0x370] sm:$0xff]
        %v365 = vld [vmem:[%s242 + $0x378] sm:$0xff]
        %v366 = vld [vmem:[%s242 + $0x380] sm:$0xff]
        %v367 = vld [vmem:[%s242 + $0x388] sm:$0xff]
        %v368 = vld [vmem:[%s242 + $0x390] sm:$0xff]
        %v369 = vld [vmem:[%s242 + $0x398] sm:$0xff]
        %v370 = vld [vmem:[%s242 + $0x3a0] sm:$0xff]
        %v371 = vld [vmem:[%s242 + $0x3a8] sm:$0xff]
        %v372 = vld [vmem:[%s242 + $0x3b0] sm:$0xff]
        %v373 = vld [vmem:[%s242 + $0x3b8] sm:$0xff]
        %v374 = vld [vmem:[%s242 + $0x3c0] sm:$0xff]
        %v375 = vld [vmem:[%s242 + $0x3c8] sm:$0xff]
        %v376 = vld [vmem:[%s242 + $0x3d0] sm:$0xff]
        %v377 = vld [vmem:[%s242 + $0x3d8] sm:$0xff]
        %v378 = vld [vmem:[%s242 + $0x3e0] sm:$0xff]
        %v379 = vld [vmem:[%s242 + $0x3e8] sm:$0xff]
        %v380 = vld [vmem:[%s242 + $0x3f0] sm:$0xff]
        %v381 = vld [vmem:[%s242 + $0x3f8] sm:$0xff]
        %v382 = vld [vmem:[%s242 + $0x400] sm:$0xff]
        %v383 = vld [vmem:[%s242 + $0x408] sm:$0xff]
        %v384 = vld [vmem:[%s242 + $0x410] sm:$0xff]
        %v385 = vld [vmem:[%s242 + $0x418] sm:$0xff]
        %v386 = vld [vmem:[%s242 + $0x420] sm:$0xff]
        %v387 = vld [vmem:[%s242 + $0x428] sm:$0xff]
        %v388 = vld [vmem:[%s242 + $0x430] sm:$0xff]
        %v389 = vld [vmem:[%s242 + $0x438] sm:$0xff]
        %v390 = vld [vmem:[%s242 + $0x440] sm:$0xff]
        %v391 = vld [vmem:[%s242 + $0x448] sm:$0xff]
        %v392 = vld [vmem:[%s242 + $0x450] sm:$0xff]
        %v393 = vld [vmem:[%s242 + $0x458] sm:$0xff]
        %v394 = vld [vmem:[%s242 + $0x460] sm:$0xff]
        %v395 = vld [vmem:[%s242 + $0x468] sm:$0xff]
        %v396 = vld [vmem:[%s242 + $0x470] sm:$0xff]
        %v397 = vld [vmem:[%s242 + $0x478] sm:$0xff]
        %v398 = vld [vmem:[%s242 + $0x480] sm:$0xff]
        %v399 = vld [vmem:[%s242 + $0x488] sm:$0xff]
        %v400 = vld [vmem:[%s242 + $0x490] sm:$0xff]
        %v401 = vld [vmem:[%s242 + $0x498] sm:$0xff]
        %v402 = vld [vmem:[%s242 + $0x4a0] sm:$0xff]
        %v403 = vld [vmem:[%s242 + $0x4a8] sm:$0xff]
        %v404 = vld [vmem:[%s242 + $0x4b0] sm:$0xff]
        %v405 = vld [vmem:[%s242 + $0x4b8] sm:$0xff]
        %v406 = vld [vmem:[%s242 + $0x4c0] sm:$0xff]
        %v407 = vld [vmem:[%s242 + $0x4c8] sm:$0xff]
        %v408 = vld [vmem:[%s242 + $0x4d0] sm:$0xff]
        %v409 = vld [vmem:[%s242 + $0x4d8] sm:$0xff]
        %v410 = vld [vmem:[%s242 + $0x4e0] sm:$0xff]
        %v411 = vld [vmem:[%s242 + $0x4e8] sm:$0xff]
        %v412 = vld [vmem:[%s242 + $0x4f0] sm:$0xff]
        %v413 = vld [vmem:[%s242 + $0x4f8] sm:$0xff]
        %v414 = vld [vmem:[%s242 + $0x500] sm:$0xff]
        %v415 = vld [vmem:[%s242 + $0x508] sm:$0xff]
        %v416 = vld [vmem:[%s242 + $0x510] sm:$0xff]
        %v417 = vld [vmem:[%s242 + $0x518] sm:$0xff]
        %v418 = vld [vmem:[%s242 + $0x520] sm:$0xff]
        %v419 = vld [vmem:[%s242 + $0x528] sm:$0xff]
        %v420 = vld [vmem:[%s242 + $0x530] sm:$0xff]
        %v421 = vld [vmem:[%s242 + $0x538] sm:$0xff]
        %v422 = vld [vmem:[%s242 + $0x540] sm:$0xff]
        %v423 = vld [vmem:[%s242 + $0x548] sm:$0xff]
        %v424 = vld [vmem:[%s242 + $0x550] sm:$0xff]
        %v425 = vld [vmem:[%s242 + $0x558] sm:$0xff]
        %v426 = vld [vmem:[%s242 + $0x560] sm:$0xff]
        %v427 = vld [vmem:[%s242 + $0x568] sm:$0xff]
        %v428 = vld [vmem:[%s242 + $0x570] sm:$0xff]
        %v429 = vld [vmem:[%s242 + $0x578] sm:$0xff]
        %v430 = vld [vmem:[%s242 + $0x580] sm:$0xff]
        %v431 = vld [vmem:[%s242 + $0x588] sm:$0xff]
        %v432 = vld [vmem:[%s242 + $0x590] sm:$0xff]
        %v433 = vld [vmem:[%s242 + $0x598] sm:$0xff]
        %v434 = vld [vmem:[%s242 + $0x5a0] sm:$0xff]
        %v435 = vld [vmem:[%s242 + $0x5a8] sm:$0xff]
        %v436 = vld [vmem:[%s242 + $0x5b0] sm:$0xff]
        %v437 = vld [vmem:[%s242 + $0x5b8] sm:$0xff]
        %v438 = vld [vmem:[%s242 + $0x5c0] sm:$0xff]
        %v439 = vld [vmem:[%s242 + $0x5c8] sm:$0xff]
        %v440 = vld [vmem:[%s242 + $0x5d0] sm:$0xff]
        %v441 = vld [vmem:[%s242 + $0x5d8] sm:$0xff]
        %v442 = vld [vmem:[%s242 + $0x5e0] sm:$0xff]
        %v443 = vld [vmem:[%s242 + $0x5e8] sm:$0xff]
        %v444 = vld [vmem:[%s242 + $0x5f0] sm:$0xff]
        %v445 = vld [vmem:[%s242 + $0x5f8] sm:$0xff]
        %v446 = vld [vmem:[%s242 + $0x600] sm:$0xff]
        %v447 = vld [vmem:[%s242 + $0x608] sm:$0xff]
        %v448 = vld [vmem:[%s242 + $0x610] sm:$0xff]
        %v449 = vld [vmem:[%s242 + $0x618] sm:$0xff]
        %v450 = vld [vmem:[%s242 + $0x620] sm:$0xff]
        %v451 = vld [vmem:[%s242 + $0x628] sm:$0xff]
        %v452 = vld [vmem:[%s242 + $0x630] sm:$0xff]
        %v453 = vld [vmem:[%s242 + $0x638] sm:$0xff]
        %v454 = vld [vmem:[%s242 + $0x640] sm:$0xff]
        %v455 = vld [vmem:[%s242 + $0x648] sm:$0xff]
        %v456 = vld [vmem:[%s242 + $0x650] sm:$0xff]
        %v457 = vld [vmem:[%s242 + $0x658] sm:$0xff]
        %v458 = vld [vmem:[%s242 + $0x660] sm:$0xff]
        %v459 = vld [vmem:[%s242 + $0x668] sm:$0xff]
        %v460 = vld [vmem:[%s242 + $0x670] sm:$0xff]
        %v461 = vld [vmem:[%s242 + $0x678] sm:$0xff]
        %v462 = vld [vmem:[%s242 + $0x680] sm:$0xff]
        %v463 = vld [vmem:[%s242 + $0x688] sm:$0xff]
        %v464 = vld [vmem:[%s242 + $0x690] sm:$0xff]
        %v465 = vld [vmem:[%s242 + $0x698] sm:$0xff]
        %v466 = vld [vmem:[%s242 + $0x6a0] sm:$0xff]
        %v467 = vld [vmem:[%s242 + $0x6a8] sm:$0xff]
        %v468 = vld [vmem:[%s242 + $0x6b0] sm:$0xff]
        %v469 = vld [vmem:[%s242 + $0x6b8] sm:$0xff]
        %v470 = vld [vmem:[%s242 + $0x6c0] sm:$0xff]
        %v471 = vld [vmem:[%s242 + $0x6c8] sm:$0xff]
        %v472 = vld [vmem:[%s242 + $0x6d0] sm:$0xff]
        %v473 = vld [vmem:[%s242 + $0x6d8] sm:$0xff]
        %v474 = vld [vmem:[%s242 + $0x6e0] sm:$0xff]
        %v475 = vld [vmem:[%s242 + $0x6e8] sm:$0xff]
        %v476 = vld [vmem:[%s242 + $0x6f0] sm:$0xff]
        %v477 = vld [vmem:[%s242 + $0x6f8] sm:$0xff]
        %v478 = vld [vmem:[%s1] sm:$0xff]
        %v479 = vld [vmem:[%s1 + $0x8] sm:$0xff]
        %v480 = vld [vmem:[%s1 + $0x10] sm:$0xff]
        %v481 = vld [vmem:[%s1 + $0x18] sm:$0xff]
        %v482 = vld [vmem:[%s1 + $0x20] sm:$0xff]
        %v483 = vld [vmem:[%s1 + $0x28] sm:$0xff]
        %v484 = vld [vmem:[%s1 + $0x30] sm:$0xff]
        %v485 = vld [vmem:[%s1 + $0x38] sm:$0xff]
        %v486 = vld [vmem:[%s1 + $0x40] sm:$0xff]
        %v487 = vld [vmem:[%s1 + $0x48] sm:$0xff]
        %v488 = vld [vmem:[%s1 + $0x50] sm:$0xff]
        %v489 = vld [vmem:[%s1 + $0x58] sm:$0xff]
        %v490 = vld [vmem:[%s1 + $0x60] sm:$0xff]
        %v491 = vld [vmem:[%s1 + $0x68] sm:$0xff]
        %v492 = vld [vmem:[%s1 + $0x70] sm:$0xff]
        %v493 = vld [vmem:[%s1 + $0x78] sm:$0xff]
        %v494 = vld [vmem:[%s1 + $0x80] sm:$0xff]
        %v495 = vld [vmem:[%s1 + $0x88] sm:$0xff]
        %v496 = vld [vmem:[%s1 + $0x90] sm:$0xff]
        %v497 = vld [vmem:[%s1 + $0x98] sm:$0xff]
        %v498 = vld [vmem:[%s1 + $0xa0] sm:$0xff]
        %v499 = vld [vmem:[%s1 + $0xa8] sm:$0xff]
        %v500 = vld [vmem:[%s1 + $0xb0] sm:$0xff]
        %v501 = vld [vmem:[%s1 + $0xb8] sm:$0xff]
        %v502 = vld [vmem:[%s1 + $0xc0] sm:$0xff]
        %v503 = vld [vmem:[%s1 + $0xc8] sm:$0xff]
        %v504 = vld [vmem:[%s1 + $0xd0] sm:$0xff]
        %v505 = vld [vmem:[%s1 + $0xd8] sm:$0xff]
        %v506 = vld [vmem:[%s1 + $0xe0] sm:$0xff]
        %v507 = vld [vmem:[%s1 + $0xe8] sm:$0xff]
        %v508 = vld [vmem:[%s1 + $0xf0] sm:$0xff]
        %v509 = vld [vmem:[%s1 + $0xf8] sm:$0xff]
        %v510 = vld [vmem:[%s1 + $0x100] sm:$0xff]
        %v511 = vld [vmem:[%s1 + $0x108] sm:$0xff]
        %v512 = vld [vmem:[%s1 + $0x110] sm:$0xff]
        %v513 = vld [vmem:[%s1 + $0x118] sm:$0xff]
        %v514 = vld [vmem:[%s1 + $0x120] sm:$0xff]
        %v515 = vld [vmem:[%s1 + $0x128] sm:$0xff]
        %v516 = vld [vmem:[%s1 + $0x130] sm:$0xff]
        %v517 = vld [vmem:[%s1 + $0x138] sm:$0xff]
        %v518 = vld [vmem:[%s1 + $0x140] sm:$0xff]
        %v519 = vld [vmem:[%s1 + $0x148] sm:$0xff]
        %v520 = vld [vmem:[%s1 + $0x150] sm:$0xff]
        %v521 = vld [vmem:[%s1 + $0x158] sm:$0xff]
        %v522 = vld [vmem:[%s1 + $0x160] sm:$0xff]
        %v523 = vld [vmem:[%s1 + $0x168] sm:$0xff]
        %v524 = vld [vmem:[%s1 + $0x170] sm:$0xff]
        %v525 = vld [vmem:[%s1 + $0x178] sm:$0xff]
        %v526 = vld [vmem:[%s1 + $0x180] sm:$0xff]
        %v527 = vld [vmem:[%s1 + $0x188] sm:$0xff]
        %v528 = vld [vmem:[%s1 + $0x190] sm:$0xff]
        %v529 = vld [vmem:[%s1 + $0x198] sm:$0xff]
        %v530 = vld [vmem:[%s1 + $0x1a0] sm:$0xff]
        %v531 = vld [vmem:[%s1 + $0x1a8] sm:$0xff]
        %v532 = vld [vmem:[%s1 + $0x1b0] sm:$0xff]
        %v533 = vld [vmem:[%s1 + $0x1b8] sm:$0xff]
        %v534 = vld [vmem:[%s1 + $0x1c0] sm:$0xff]
        %v535 = vld [vmem:[%s1 + $0x1c8] sm:$0xff]
        %v536 = vld [vmem:[%s1 + $0x1d0] sm:$0xff]
        %v537 = vld [vmem:[%s1 + $0x1d8] sm:$0xff]
        %v538 = vld [vmem:[%s1 + $0x1e0] sm:$0xff]
        %v539 = vld [vmem:[%s1 + $0x1e8] sm:$0xff]
        %v540 = vld [vmem:[%s1 + $0x1f0] sm:$0xff]
        %v541 = vld [vmem:[%s1 + $0x1f8] sm:$0xff]
        %v542 = vld [vmem:[%s1 + $0x200] sm:$0xff]
        %v543 = vld [vmem:[%s1 + $0x208] sm:$0xff]
        %v544 = vld [vmem:[%s1 + $0x210] sm:$0xff]
        %v545 = vld [vmem:[%s1 + $0x218] sm:$0xff]
        %v546 = vld [vmem:[%s1 + $0x220] sm:$0xff]
        %v547 = vld [vmem:[%s1 + $0x228] sm:$0xff]
        %v548 = vld [vmem:[%s1 + $0x230] sm:$0xff]
        %v549 = vld [vmem:[%s1 + $0x238] sm:$0xff]
        %v550 = vld [vmem:[%s1 + $0x240] sm:$0xff]
        %v551 = vld [vmem:[%s1 + $0x248] sm:$0xff]
        %v552 = vld [vmem:[%s1 + $0x250] sm:$0xff]
        %v553 = vld [vmem:[%s1 + $0x258] sm:$0xff]
        %v554 = vld [vmem:[%s1 + $0x260] sm:$0xff]
        %v555 = vld [vmem:[%s1 + $0x268] sm:$0xff]
        %v556 = vld [vmem:[%s1 + $0x270] sm:$0xff]
        %v557 = vld [vmem:[%s1 + $0x278] sm:$0xff]
        %v558 = vld [vmem:[%s1 + $0x280] sm:$0xff]
        %v559 = vld [vmem:[%s1 + $0x288] sm:$0xff]
        %v560 = vld [vmem:[%s1 + $0x290] sm:$0xff]
        %v561 = vld [vmem:[%s1 + $0x298] sm:$0xff]
        %v562 = vld [vmem:[%s1 + $0x2a0] sm:$0xff]
        %v563 = vld [vmem:[%s1 + $0x2a8] sm:$0xff]
        %v564 = vld [vmem:[%s1 + $0x2b0] sm:$0xff]
        %v565 = vld [vmem:[%s1 + $0x2b8] sm:$0xff]
        %v566 = vld [vmem:[%s1 + $0x2c0] sm:$0xff]
        %v567 = vld [vmem:[%s1 + $0x2c8] sm:$0xff]
        %v568 = vld [vmem:[%s1 + $0x2d0] sm:$0xff]
        %v569 = vld [vmem:[%s1 + $0x2d8] sm:$0xff]
        %v570 = vld [vmem:[%s1 + $0x2e0] sm:$0xff]
        %v571 = vld [vmem:[%s1 + $0x2e8] sm:$0xff]
        %v572 = vld [vmem:[%s1 + $0x2f0] sm:$0xff]
        %v573 = vld [vmem:[%s1 + $0x2f8] sm:$0xff]
        %v574 = vld [vmem:[%s1 + $0x300] sm:$0xff]
        %v575 = vld [vmem:[%s1 + $0x308] sm:$0xff]
        %v576 = vld [vmem:[%s2] sm:$0x1]
        %v578 = vlaneseq
        %v579 = vshrl.u32 %v578, 7
        %v580 = vsub.s32 0, %v579
        %v581 = vrot.slane %v576, %v580
        %vm583 = vcmask 130048
        %v585 = vsel %vm583, %v260, 0
        %v588 = vsel %vm583, %v267, 0
        %v591 = vsel %vm583, %v274, 0
        %v594 = vsel %vm583, %v281, 0
        %v597 = vsel %vm583, %v288, 0
        %v600 = vsel %vm583, %v295, 0
        %v603 = vsel %vm583, %v302, 0
        %v606 = vsel %vm583, %v309, 0
        %v609 = vsel %vm583, %v316, 0
        %v612 = vsel %vm583, %v323, 0
        %v615 = vsel %vm583, %v330, 0
        %v618 = vsel %vm583, %v337, 0
        %v621 = vsel %vm583, %v344, 0
        %v624 = vsel %vm583, %v351, 0
        %v627 = vsel %vm583, %v358, 0
        %v630 = vsel %vm583, %v365, 0
        %v633 = vsel %vm583, %v372, 0
        %v636 = vsel %vm583, %v379, 0
        %v639 = vsel %vm583, %v386, 0
        %v642 = vsel %vm583, %v393, 0
        %v645 = vsel %vm583, %v400, 0
        %v648 = vsel %vm583, %v407, 0
        %v651 = vsel %vm583, %v414, 0
        %v654 = vsel %vm583, %v421, 0
        %v657 = vsel %vm583, %v428, 0
        %v660 = vsel %vm583, %v435, 0
        %v663 = vsel %vm583, %v442, 0
        %v666 = vsel %vm583, %v449, 0
        %v669 = vsel %vm583, %v456, 0
        %v672 = vsel %vm583, %v463, 0
        %v675 = vsel %vm583, %v470, 0
        %v678 = vsel %vm583, %v477, 0
        %680 = vmatprep.subr.mxu0 0.0
        %681 = vmatpush1.msra.mxu0 %v478
        %682 = vmatprep.subr.mxu0 0.0
        %683 = vmatpush1.msra.mxu0 %v479
        %684 = vmatprep.subr.mxu0 0.0
        %685 = vmatpush1.msra.mxu0 %v480
        %686 = vmatprep.subr.mxu0 0.0
        %687 = vmatpush1.msra.mxu0 %v481
        %688 = vmatprep.subr.mxu0 0.0
        %689 = vmatpush1.msra.mxu0 %v482
        %690 = vmatprep.subr.mxu0 0.0
        %691 = vmatpush1.msra.mxu0 %v483
        %692 = vmatprep.subr.mxu0 0.0
        %693 = vmatpush1.msra.mxu0 %v484
        %694 = vmatprep.subr.mxu0 0.0
        %695 = vmatpush1.msra.mxu0 %v485
        %696 = vmatprep.subr.mxu0 0.0
        %697 = vmatpush1.msra.mxu0 %v486
        %698 = vmatprep.subr.mxu0 0.0
        %699 = vmatpush1.msra.mxu0 %v487
        %700 = vmatprep.subr.mxu0 0.0
        %701 = vmatpush1.msra.mxu0 %v488
        %702 = vmatprep.subr.mxu0 0.0
        %703 = vmatpush1.msra.mxu0 %v489
        %704 = vmatprep.subr.mxu0 0.0
        %705 = vmatpush1.msra.mxu0 %v490
        %706 = vmatprep.subr.mxu0 0.0
        %707 = vmatpush1.msra.mxu0 %v491
        %708 = vmatprep.subr.mxu0 0.0
        %709 = vmatpush1.msra.mxu0 %v492
        %710 = vmatprep.subr.mxu0 0.0
        %711 = vmatpush1.msra.mxu0 %v493
        %712 = vmatprep.subr.mxu0 0.0
        %713 = vmatpush1.msra.mxu0 %v494
        %714 = vmatprep.subr.mxu0 0.0
        %715 = vmatpush1.msra.mxu0 %v495
        %716 = vmatprep.subr.mxu0 0.0
        %717 = vmatpush1.msra.mxu0 %v496
        %718 = vmatprep.subr.mxu0 0.0
        %719 = vmatpush1.msra.mxu0 %v497
        %720 = vmatprep.subr.mxu0 0.0
        %721 = vmatpush1.msra.mxu0 %v498
        %722 = vmatprep.subr.mxu0 0.0
        %723 = vmatpush1.msra.mxu0 %v499
        %724 = vmatprep.subr.mxu0 0.0
        %725 = vmatpush1.msra.mxu0 %v500
        %726 = vmatprep.subr.mxu0 0.0
        %727 = vmatpush1.msra.mxu0 %v501
        %728 = vmatprep.subr.mxu0 0.0
        %729 = vmatpush1.msra.mxu0 %v502
        %730 = vmatprep.subr.mxu0 0.0
        %731 = vmatpush1.msra.mxu0 %v503
        %732 = vmatprep.subr.mxu0 0.0
        %733 = vmatpush1.msra.mxu0 %v504
        %734 = vmatprep.subr.mxu0 0.0
        %735 = vmatpush1.msra.mxu0 %v505
        %736 = vmatprep.subr.mxu0 0.0
        %737 = vmatpush1.msra.mxu0 %v506
        %738 = vmatprep.subr.mxu0 0.0
        %739 = vmatpush1.msra.mxu0 %v507
        %740 = vmatprep.subr.mxu0 0.0
        %741 = vmatpush1.msra.mxu0 %v508
        %742 = vmatprep.subr.mxu0 0.0
        %743 = vmatpush1.msra.mxu0 %v509
        %744 = vmatprep.mubr.f32.mxu0 %v255
        %745 = vmatmul.mubr.f32.gmra.mrb[0].mxu0 %v254
        %v746 = vpop.f32.mrb[0].mxu0
        %v747 = vadd.f32 %v581, %v746
        %v748 = vpop.f32.mrb[0].mxu0
        %749 = vmatprep.mubr.f32.mxu0 %v262
        %750 = vmatmul.mubr.f32.gmra.mrb[0].mxu0 %v261
        %v751 = vpop.f32.mrb[0].mxu0
        %v752 = vadd.f32 %v581, %v751
        %v753 = vpop.f32.mrb[0].mxu0
        %754 = vmatprep.mubr.f32.mxu0 %v269
        %755 = vmatmul.mubr.f32.gmra.mrb[0].mxu0 %v268
        %v756 = vpop.f32.mrb[0].mxu0
        %v757 = vadd.f32 %v581, %v756
        %v758 = vpop.f32.mrb[0].mxu0
        %759 = vmatprep.mubr.f32.mxu0 %v276
        %760 = vmatmul.mubr.f32.gmra.mrb[0].mxu0 %v275
        %v761 = vpop.f32.mrb[0].mxu0
        %v762 = vadd.f32 %v581, %v761
        %v763 = vpop.f32.mrb[0].mxu0
        %764 = vmatprep.mubr.f32.mxu0 %v283
        %765 = vmatmul.mubr.f32.gmra.mrb[0].mxu0 %v282
        %v766 = vpop.f32.mrb[0].mxu0
        %v767 = vadd.f32 %v581, %v766
        %v768 = vpop.f32.mrb[0].mxu0
        %769 = vmatprep.mubr.f32.mxu0 %v290
        %770 = vmatmul.mubr.f32.gmra.mrb[0].mxu0 %v289
        %v771 = vpop.f32.mrb[0].mxu0
        %v772 = vadd.f32 %v581, %v771
        %v773 = vpop.f32.mrb[0].mxu0
        %774 = vmatprep.mubr.f32.mxu0 %v297
        %775 = vmatmul.mubr.f32.gmra.mrb[0].mxu0 %v296
        %v776 = vpop.f32.mrb[0].mxu0
        %v777 = vadd.f32 %v581, %v776
        %v778 = vpop.f32.mrb[0].mxu0
        %779 = vmatprep.mubr.f32.mxu0 %v304
        %780 = vmatmul.mubr.f32.gmra.mrb[0].mxu0 %v303
        %v781 = vpop.f32.mrb[0].mxu0
        %v782 = vadd.f32 %v581, %v781
        %v783 = vpop.f32.mrb[0].mxu0
        %784 = vmatprep.mubr.f32.mxu0 %v311
        %785 = vmatmul.mubr.f32.gmra.mrb[0].mxu0 %v310
        %v786 = vpop.f32.mrb[0].mxu0
        %v787 = vadd.f32 %v581, %v786
        %v788 = vpop.f32.mrb[0].mxu0
        %789 = vmatprep.mubr.f32.mxu0 %v318
        %790 = vmatmul.mubr.f32.gmra.mrb[0].mxu0 %v317
        %v791 = vpop.f32.mrb[0].mxu0
        %v792 = vadd.f32 %v581, %v791
        %v793 = vpop.f32.mrb[0].mxu0
        %794 = vmatprep.mubr.f32.mxu0 %v325
        %795 = vmatmul.mubr.f32.gmra.mrb[0].mxu0 %v324
        %v796 = vpop.f32.mrb[0].mxu0
        %v797 = vadd.f32 %v581, %v796
        %v798 = vpop.f32.mrb[0].mxu0
        %799 = vmatprep.mubr.f32.mxu0 %v332
        %800 = vmatmul.mubr.f32.gmra.mrb[0].mxu0 %v331
        %v801 = vpop.f32.mrb[0].mxu0
        %v802 = vadd.f32 %v581, %v801
        %v803 = vpop.f32.mrb[0].mxu0
        %804 = vmatprep.mubr.f32.mxu0 %v339
        %805 = vmatmul.mubr.f32.gmra.mrb[0].mxu0 %v338
        %v806 = vpop.f32.mrb[0].mxu0
        %v807 = vadd.f32 %v581, %v806
        %v808 = vpop.f32.mrb[0].mxu0
        %809 = vmatprep.mubr.f32.mxu0 %v346
        %810 = vmatmul.mubr.f32.gmra.mrb[0].mxu0 %v345
        %v811 = vpop.f32.mrb[0].mxu0
        %v812 = vadd.f32 %v581, %v811
        %v813 = vpop.f32.mrb[0].mxu0
        %814 = vmatprep.mubr.f32.mxu0 %v353
        %815 = vmatmul.mubr.f32.gmra.mrb[0].mxu0 %v352
        %v816 = vpop.f32.mrb[0].mxu0
        %v817 = vadd.f32 %v581, %v816
        %v818 = vpop.f32.mrb[0].mxu0
        %819 = vmatprep.mubr.f32.mxu0 %v360
        %820 = vmatmul.mubr.f32.gmra.mrb[0].mxu0 %v359
        %v821 = vpop.f32.mrb[0].mxu0
        %v822 = vadd.f32 %v581, %v821
        %v823 = vpop.f32.mrb[0].mxu0
        %824 = vmatprep.mubr.f32.mxu0 %v367
        %825 = vmatmul.mubr.f32.gmra.mrb[0].mxu0 %v366
        %v826 = vpop.f32.mrb[0].mxu0
        %v827 = vadd.f32 %v581, %v826
        %v828 = vpop.f32.mrb[0].mxu0
        %829 = vmatprep.mubr.f32.mxu0 %v374
        %830 = vmatmul.mubr.f32.gmra.mrb[0].mxu0 %v373
        %v831 = vpop.f32.mrb[0].mxu0
        %v832 = vadd.f32 %v581, %v831
        %v833 = vpop.f32.mrb[0].mxu0
        %834 = vmatprep.mubr.f32.mxu0 %v381
        %835 = vmatmul.mubr.f32.gmra.mrb[0].mxu0 %v380
        %v836 = vpop.f32.mrb[0].mxu0
        %v837 = vadd.f32 %v581, %v836
        %v838 = vpop.f32.mrb[0].mxu0
        %839 = vmatprep.mubr.f32.mxu0 %v388
        %840 = vmatmul.mubr.f32.gmra.mrb[0].mxu0 %v387
        %v841 = vpop.f32.mrb[0].mxu0
        %v842 = vadd.f32 %v581, %v841
        %v843 = vpop.f32.mrb[0].mxu0
        %844 = vmatprep.mubr.f32.mxu0 %v395
        %845 = vmatmul.mubr.f32.gmra.mrb[0].mxu0 %v394
        %v846 = vpop.f32.mrb[0].mxu0
        %v847 = vadd.f32 %v581, %v846
        %v848 = vpop.f32.mrb[0].mxu0
        %849 = vmatprep.mubr.f32.mxu0 %v402
        %850 = vmatmul.mubr.f32.gmra.mrb[0].mxu0 %v401
        %v851 = vpop.f32.mrb[0].mxu0
        %v852 = vadd.f32 %v581, %v851
        %v853 = vpop.f32.mrb[0].mxu0
        %854 = vmatprep.mubr.f32.mxu0 %v409
        %855 = vmatmul.mubr.f32.gmra.mrb[0].mxu0 %v408
        %v856 = vpop.f32.mrb[0].mxu0
        %v857 = vadd.f32 %v581, %v856
        %v858 = vpop.f32.mrb[0].mxu0
        %859 = vmatprep.mubr.f32.mxu0 %v416
        %860 = vmatmul.mubr.f32.gmra.mrb[0].mxu0 %v415
        %v861 = vpop.f32.mrb[0].mxu0
        %v862 = vadd.f32 %v581, %v861
        %v863 = vpop.f32.mrb[0].mxu0
        %864 = vmatprep.mubr.f32.mxu0 %v423
        %865 = vmatmul.mubr.f32.gmra.mrb[0].mxu0 %v422
        %v866 = vpop.f32.mrb[0].mxu0
        %v867 = vadd.f32 %v581, %v866
        %v868 = vpop.f32.mrb[0].mxu0
        %869 = vmatprep.mubr.f32.mxu0 %v430
        %870 = vmatmul.mubr.f32.gmra.mrb[0].mxu0 %v429
        %v871 = vpop.f32.mrb[0].mxu0
        %v872 = vadd.f32 %v581, %v871
        %v873 = vpop.f32.mrb[0].mxu0
        %874 = vmatprep.mubr.f32.mxu0 %v437
        %875 = vmatmul.mubr.f32.gmra.mrb[0].mxu0 %v436
        %v876 = vpop.f32.mrb[0].mxu0
        %v877 = vadd.f32 %v581, %v876
        %v878 = vpop.f32.mrb[0].mxu0
        %879 = vmatprep.mubr.f32.mxu0 %v444
        %880 = vmatmul.mubr.f32.gmra.mrb[0].mxu0 %v443
        %v881 = vpop.f32.mrb[0].mxu0
        %v882 = vadd.f32 %v581, %v881
        %v883 = vpop.f32.mrb[0].mxu0
        %884 = vmatprep.mubr.f32.mxu0 %v451
        %885 = vmatmul.mubr.f32.gmra.mrb[0].mxu0 %v450
        %v886 = vpop.f32.mrb[0].mxu0
        %v887 = vadd.f32 %v581, %v886
        %v888 = vpop.f32.mrb[0].mxu0
        %889 = vmatprep.mubr.f32.mxu0 %v458
        %890 = vmatmul.mubr.f32.gmra.mrb[0].mxu0 %v457
        %v891 = vpop.f32.mrb[0].mxu0
        %v892 = vadd.f32 %v581, %v891
        %v893 = vpop.f32.mrb[0].mxu0
        %894 = vmatprep.mubr.f32.mxu0 %v465
        %895 = vmatmul.mubr.f32.gmra.mrb[0].mxu0 %v464
        %v896 = vpop.f32.mrb[0].mxu0
        %v897 = vadd.f32 %v581, %v896
        %v898 = vpop.f32.mrb[0].mxu0
        %899 = vmatprep.mubr.f32.mxu0 %v472
        %900 = vmatmul.mubr.f32.gmra.mrb[0].mxu0 %v471
        %v901 = vpop.f32.mrb[0].mxu0
        %v902 = vadd.f32 %v581, %v901
        %v903 = vpop.f32.mrb[0].mxu0
        %904 = vdwg.mxu0
        %905 = vmatprep.subr.mxu0 0.0
        %906 = vmatpush1.msra.mxu0 %v510
        %907 = vmatprep.subr.mxu0 0.0
        %908 = vmatpush1.msra.mxu0 %v511
        %909 = vmatprep.subr.mxu0 0.0
        %910 = vmatpush1.msra.mxu0 %v512
        %911 = vmatprep.subr.mxu0 0.0
        %912 = vmatpush1.msra.mxu0 %v513
        %913 = vmatprep.subr.mxu0 0.0
        %914 = vmatpush1.msra.mxu0 %v514
        %915 = vmatprep.subr.mxu0 0.0
        %916 = vmatpush1.msra.mxu0 %v515
        %917 = vmatprep.subr.mxu0 0.0
        %918 = vmatpush1.msra.mxu0 %v516
        %919 = vmatprep.subr.mxu0 0.0
        %920 = vmatpush1.msra.mxu0 %v517
        %921 = vmatprep.subr.mxu0 0.0
        %922 = vmatpush1.msra.mxu0 %v518
        %923 = vmatprep.subr.mxu0 0.0
        %924 = vmatpush1.msra.mxu0 %v519
        %925 = vmatprep.subr.mxu0 0.0
        %926 = vmatpush1.msra.mxu0 %v520
        %927 = vmatprep.subr.mxu0 0.0
        %928 = vmatpush1.msra.mxu0 %v521
        %929 = vmatprep.subr.mxu0 0.0
        %930 = vmatpush1.msra.mxu0 %v522
        %931 = vmatprep.subr.mxu0 0.0
        %932 = vmatpush1.msra.mxu0 %v523
        %933 = vmatprep.subr.mxu0 0.0
        %934 = vmatpush1.msra.mxu0 %v524
        %935 = vmatprep.subr.mxu0 0.0
        %936 = vmatpush1.msra.mxu0 %v525
        %937 = vmatprep.subr.mxu0 0.0
        %938 = vmatpush1.msra.mxu0 %v526
        %939 = vmatprep.subr.mxu0 0.0
        %940 = vmatpush1.msra.mxu0 %v527
        %941 = vmatprep.subr.mxu0 0.0
        %942 = vmatpush1.msra.mxu0 %v528
        %943 = vmatprep.subr.mxu0 0.0
        %944 = vmatpush1.msra.mxu0 %v529
        %945 = vmatprep.subr.mxu0 0.0
        %946 = vmatpush1.msra.mxu0 %v530
        %947 = vmatprep.subr.mxu0 0.0
        %948 = vmatpush1.msra.mxu0 %v531
        %949 = vmatprep.subr.mxu0 0.0
        %950 = vmatpush1.msra.mxu0 %v532
        %951 = vmatprep.subr.mxu0 0.0
        %952 = vmatpush1.msra.mxu0 %v533
        %953 = vmatprep.subr.mxu0 0.0
        %954 = vmatpush1.msra.mxu0 %v534
        %955 = vmatprep.subr.mxu0 0.0
        %956 = vmatpush1.msra.mxu0 %v535
        %957 = vmatprep.subr.mxu0 0.0
        %958 = vmatpush1.msra.mxu0 %v536
        %959 = vmatprep.subr.mxu0 0.0
        %960 = vmatpush1.msra.mxu0 %v537
        %961 = vmatprep.subr.mxu0 0.0
        %962 = vmatpush1.msra.mxu0 %v538
        %963 = vmatprep.subr.mxu0 0.0
        %964 = vmatpush1.msra.mxu0 %v539
        %965 = vmatprep.subr.mxu0 0.0
        %966 = vmatpush1.msra.mxu0 %v540
        %967 = vmatprep.subr.mxu0 0.0
        %968 = vmatpush1.msra.mxu0 %v541
        %969 = vmatprep.mubr.f32.mxu0 %v257
        %970 = vmatmul.mubr.f32.gmra.mrb[0].mxu0 %v256
        %v971 = vpop.f32.mrb[0].mxu0
        %v972 = vadd.f32 %v747, %v971
        %v973 = vpop.f32.mrb[0].mxu0
        %974 = vmatprep.mubr.f32.mxu0 %v264
        %975 = vmatmul.mubr.f32.gmra.mrb[0].mxu0 %v263
        %v976 = vpop.f32.mrb[0].mxu0
        %v977 = vadd.f32 %v752, %v976
        %v978 = vpop.f32.mrb[0].mxu0
        %979 = vmatprep.mubr.f32.mxu0 %v271
        %980 = vmatmul.mubr.f32.gmra.mrb[0].mxu0 %v270
        %v981 = vpop.f32.mrb[0].mxu0
        %v982 = vadd.f32 %v757, %v981
        %v983 = vpop.f32.mrb[0].mxu0
        %984 = vmatprep.mubr.f32.mxu0 %v278
        %985 = vmatmul.mubr.f32.gmra.mrb[0].mxu0 %v277
        %v986 = vpop.f32.mrb[0].mxu0
        %v987 = vadd.f32 %v762, %v986
        %v988 = vpop.f32.mrb[0].mxu0
        %989 = vmatprep.mubr.f32.mxu0 %v285
        %990 = vmatmul.mubr.f32.gmra.mrb[0].mxu0 %v284
        %v991 = vpop.f32.mrb[0].mxu0
        %v992 = vadd.f32 %v767, %v991
        %v993 = vpop.f32.mrb[0].mxu0
        %994 = vmatprep.mubr.f32.mxu0 %v292
        %995 = vmatmul.mubr.f32.gmra.mrb[0].mxu0 %v291
        %v996 = vpop.f32.mrb[0].mxu0
        %v997 = vadd.f32 %v772, %v996
        %v998 = vpop.f32.mrb[0].mxu0
        %999 = vmatprep.mubr.f32.mxu0 %v299
        %1000 = vmatmul.mubr.f32.gmra.mrb[0].mxu0 %v298
        %v1001 = vpop.f32.mrb[0].mxu0
        %v1002 = vadd.f32 %v777, %v1001
        %v1003 = vpop.f32.mrb[0].mxu0
        %1004 = vmatprep.mubr.f32.mxu0 %v306
        %1005 = vmatmul.mubr.f32.gmra.mrb[0].mxu0 %v305
        %v1006 = vpop.f32.mrb[0].mxu0
        %v1007 = vadd.f32 %v782, %v1006
        %v1008 = vpop.f32.mrb[0].mxu0
        %1009 = vmatprep.mubr.f32.mxu0 %v313
        %1010 = vmatmul.mubr.f32.gmra.mrb[0].mxu0 %v312
        %v1011 = vpop.f32.mrb[0].mxu0
        %v1012 = vadd.f32 %v787, %v1011
        %v1013 = vpop.f32.mrb[0].mxu0
        %1014 = vmatprep.mubr.f32.mxu0 %v320
        %1015 = vmatmul.mubr.f32.gmra.mrb[0].mxu0 %v319
        %v1016 = vpop.f32.mrb[0].mxu0
        %v1017 = vadd.f32 %v792, %v1016
        %v1018 = vpop.f32.mrb[0].mxu0
        %1019 = vmatprep.mubr.f32.mxu0 %v327
        %1020 = vmatmul.mubr.f32.gmra.mrb[0].mxu0 %v326
        %v1021 = vpop.f32.mrb[0].mxu0
        %v1022 = vadd.f32 %v797, %v1021
        %v1023 = vpop.f32.mrb[0].mxu0
        %1024 = vmatprep.mubr.f32.mxu0 %v334
        %1025 = vmatmul.mubr.f32.gmra.mrb[0].mxu0 %v333
        %v1026 = vpop.f32.mrb[0].mxu0
        %v1027 = vadd.f32 %v802, %v1026
        %v1028 = vpop.f32.mrb[0].mxu0
        %1029 = vmatprep.mubr.f32.mxu0 %v341
        %1030 = vmatmul.mubr.f32.gmra.mrb[0].mxu0 %v340
        %v1031 = vpop.f32.mrb[0].mxu0
        %v1032 = vadd.f32 %v807, %v1031
        %v1033 = vpop.f32.mrb[0].mxu0
        %1034 = vmatprep.mubr.f32.mxu0 %v348
        %1035 = vmatmul.mubr.f32.gmra.mrb[0].mxu0 %v347
        %v1036 = vpop.f32.mrb[0].mxu0
        %v1037 = vadd.f32 %v812, %v1036
        %v1038 = vpop.f32.mrb[0].mxu0
        %1039 = vmatprep.mubr.f32.mxu0 %v355
        %1040 = vmatmul.mubr.f32.gmra.mrb[0].mxu0 %v354
        %v1041 = vpop.f32.mrb[0].mxu0
        %v1042 = vadd.f32 %v817, %v1041
        %v1043 = vpop.f32.mrb[0].mxu0
        %1044 = vmatprep.mubr.f32.mxu0 %v362
        %1045 = vmatmul.mubr.f32.gmra.mrb[0].mxu0 %v361
        %v1046 = vpop.f32.mrb[0].mxu0
        %v1047 = vadd.f32 %v822, %v1046
        %v1048 = vpop.f32.mrb[0].mxu0
        %1049 = vmatprep.mubr.f32.mxu0 %v369
        %1050 = vmatmul.mubr.f32.gmra.mrb[0].mxu0 %v368
        %v1051 = vpop.f32.mrb[0].mxu0
        %v1052 = vadd.f32 %v827, %v1051
        %v1053 = vpop.f32.mrb[0].mxu0
        %1054 = vmatprep.mubr.f32.mxu0 %v376
        %1055 = vmatmul.mubr.f32.gmra.mrb[0].mxu0 %v375
        %v1056 = vpop.f32.mrb[0].mxu0
        %v1057 = vadd.f32 %v832, %v1056
        %v1058 = vpop.f32.mrb[0].mxu0
        %1059 = vmatprep.mubr.f32.mxu0 %v383
        %1060 = vmatmul.mubr.f32.gmra.mrb[0].mxu0 %v382
        %v1061 = vpop.f32.mrb[0].mxu0
        %v1062 = vadd.f32 %v837, %v1061
        %v1063 = vpop.f32.mrb[0].mxu0
        %1064 = vmatprep.mubr.f32.mxu0 %v390
        %1065 = vmatmul.mubr.f32.gmra.mrb[0].mxu0 %v389
        %v1066 = vpop.f32.mrb[0].mxu0
        %v1067 = vadd.f32 %v842, %v1066
        %v1068 = vpop.f32.mrb[0].mxu0
        %1069 = vmatprep.mubr.f32.mxu0 %v397
        %1070 = vmatmul.mubr.f32.gmra.mrb[0].mxu0 %v396
        %v1071 = vpop.f32.mrb[0].mxu0
        %v1072 = vadd.f32 %v847, %v1071
        %v1073 = vpop.f32.mrb[0].mxu0
        %1074 = vmatprep.mubr.f32.mxu0 %v404
        %1075 = vmatmul.mubr.f32.gmra.mrb[0].mxu0 %v403
        %v1076 = vpop.f32.mrb[0].mxu0
        %v1077 = vadd.f32 %v852, %v1076
        %v1078 = vpop.f32.mrb[0].mxu0
        %1079 = vmatprep.mubr.f32.mxu0 %v411
        %1080 = vmatmul.mubr.f32.gmra.mrb[0].mxu0 %v410
        %v1081 = vpop.f32.mrb[0].mxu0
        %v1082 = vadd.f32 %v857, %v1081
        %v1083 = vpop.f32.mrb[0].mxu0
        %1084 = vmatprep.mubr.f32.mxu0 %v418
        %1085 = vmatmul.mubr.f32.gmra.mrb[0].mxu0 %v417
        %v1086 = vpop.f32.mrb[0].mxu0
        %v1087 = vadd.f32 %v862, %v1086
        %v1088 = vpop.f32.mrb[0].mxu0
        %1089 = vmatprep.mubr.f32.mxu0 %v425
        %1090 = vmatmul.mubr.f32.gmra.mrb[0].mxu0 %v424
        %v1091 = vpop.f32.mrb[0].mxu0
        %v1092 = vadd.f32 %v867, %v1091
        %v1093 = vpop.f32.mrb[0].mxu0
        %1094 = vmatprep.mubr.f32.mxu0 %v432
        %1095 = vmatmul.mubr.f32.gmra.mrb[0].mxu0 %v431
        %v1096 = vpop.f32.mrb[0].mxu0
        %v1097 = vadd.f32 %v872, %v1096
        %v1098 = vpop.f32.mrb[0].mxu0
        %1099 = vmatprep.mubr.f32.mxu0 %v439
        %1100 = vmatmul.mubr.f32.gmra.mrb[0].mxu0 %v438
        %v1101 = vpop.f32.mrb[0].mxu0
        %v1102 = vadd.f32 %v877, %v1101
        %v1103 = vpop.f32.mrb[0].mxu0
        %1104 = vmatprep.mubr.f32.mxu0 %v446
        %1105 = vmatmul.mubr.f32.gmra.mrb[0].mxu0 %v445
        %v1106 = vpop.f32.mrb[0].mxu0
        %v1107 = vadd.f32 %v882, %v1106
        %v1108 = vpop.f32.mrb[0].mxu0
        %1109 = vmatprep.mubr.f32.mxu0 %v453
        %1110 = vmatmul.mubr.f32.gmra.mrb[0].mxu0 %v452
        %v1111 = vpop.f32.mrb[0].mxu0
        %v1112 = vadd.f32 %v887, %v1111
        %v1113 = vpop.f32.mrb[0].mxu0
        %1114 = vmatprep.mubr.f32.mxu0 %v460
        %1115 = vmatmul.mubr.f32.gmra.mrb[0].mxu0 %v459
        %v1116 = vpop.f32.mrb[0].mxu0
        %v1117 = vadd.f32 %v892, %v1116
        %v1118 = vpop.f32.mrb[0].mxu0
        %1119 = vmatprep.mubr.f32.mxu0 %v467
        %1120 = vmatmul.mubr.f32.gmra.mrb[0].mxu0 %v466
        %v1121 = vpop.f32.mrb[0].mxu0
        %v1122 = vadd.f32 %v897, %v1121
        %v1123 = vpop.f32.mrb[0].mxu0
        %1124 = vmatprep.mubr.f32.mxu0 %v474
        %1125 = vmatmul.mubr.f32.gmra.mrb[0].mxu0 %v473
        %v1126 = vpop.f32.mrb[0].mxu0
        %v1127 = vadd.f32 %v902, %v1126
        %v1128 = vpop.f32.mrb[0].mxu0
        %1129 = vdwg.mxu0
        %1130 = vmatprep.subr.mxu0 0.0
        %1131 = vmatpush1.msra.mxu0 %v542
        %1132 = vmatprep.subr.mxu0 0.0
        %1133 = vmatpush1.msra.mxu0 %v543
        %1134 = vmatprep.subr.mxu0 0.0
        %1135 = vmatpush1.msra.mxu0 %v544
        %1136 = vmatprep.subr.mxu0 0.0
        %1137 = vmatpush1.msra.mxu0 %v545
        %1138 = vmatprep.subr.mxu0 0.0
        %1139 = vmatpush1.msra.mxu0 %v546
        %1140 = vmatprep.subr.mxu0 0.0
        %1141 = vmatpush1.msra.mxu0 %v547
        %1142 = vmatprep.subr.mxu0 0.0
        %1143 = vmatpush1.msra.mxu0 %v548
        %1144 = vmatprep.subr.mxu0 0.0
        %1145 = vmatpush1.msra.mxu0 %v549
        %1146 = vmatprep.subr.mxu0 0.0
        %1147 = vmatpush1.msra.mxu0 %v550
        %1148 = vmatprep.subr.mxu0 0.0
        %1149 = vmatpush1.msra.mxu0 %v551
        %1150 = vmatprep.subr.mxu0 0.0
        %1151 = vmatpush1.msra.mxu0 %v552
        %1152 = vmatprep.subr.mxu0 0.0
        %1153 = vmatpush1.msra.mxu0 %v553
        %1154 = vmatprep.subr.mxu0 0.0
        %1155 = vmatpush1.msra.mxu0 %v554
        %1156 = vmatprep.subr.mxu0 0.0
        %1157 = vmatpush1.msra.mxu0 %v555
        %1158 = vmatprep.subr.mxu0 0.0
        %1159 = vmatpush1.msra.mxu0 %v556
        %1160 = vmatprep.subr.mxu0 0.0
        %1161 = vmatpush1.msra.mxu0 %v557
        %1162 = vmatprep.subr.mxu0 0.0
        %1163 = vmatpush1.msra.mxu0 %v558
        %1164 = vmatprep.subr.mxu0 0.0
        %1165 = vmatpush1.msra.mxu0 %v559
        %1166 = vmatprep.subr.mxu0 0.0
        %1167 = vmatpush1.msra.mxu0 %v560
        %1168 = vmatprep.subr.mxu0 0.0
        %1169 = vmatpush1.msra.mxu0 %v561
        %1170 = vmatprep.subr.mxu0 0.0
        %1171 = vmatpush1.msra.mxu0 %v562
        %1172 = vmatprep.subr.mxu0 0.0
        %1173 = vmatpush1.msra.mxu0 %v563
        %1174 = vmatprep.subr.mxu0 0.0
        %1175 = vmatpush1.msra.mxu0 %v564
        %1176 = vmatprep.subr.mxu0 0.0
        %1177 = vmatpush1.msra.mxu0 %v565
        %1178 = vmatprep.subr.mxu0 0.0
        %1179 = vmatpush1.msra.mxu0 %v566
        %1180 = vmatprep.subr.mxu0 0.0
        %1181 = vmatpush1.msra.mxu0 %v567
        %1182 = vmatprep.subr.mxu0 0.0
        %1183 = vmatpush1.msra.mxu0 %v568
        %1184 = vmatprep.subr.mxu0 0.0
        %1185 = vmatpush1.msra.mxu0 %v569
        %1186 = vmatprep.subr.mxu0 0.0
        %1187 = vmatpush1.msra.mxu0 %v570
        %1188 = vmatprep.subr.mxu0 0.0
        %1189 = vmatpush1.msra.mxu0 %v571
        %1190 = vmatprep.subr.mxu0 0.0
        %1191 = vmatpush1.msra.mxu0 %v572
        %1192 = vmatprep.subr.mxu0 0.0
        %1193 = vmatpush1.msra.mxu0 %v573
        %1194 = vmatprep.mubr.f32.mxu0 %v259
        %1195 = vmatmul.mubr.f32.gmra.mrb[0].mxu0 %v258
        %v1196 = vpop.f32.mrb[0].mxu0
        %v1197 = vadd.f32 %v972, %v1196
        %v1198 = vpop.f32.mrb[0].mxu0
        %1199 = vmatprep.mubr.f32.mxu0 %v266
        %1200 = vmatmul.mubr.f32.gmra.mrb[0].mxu0 %v265
        %v1201 = vpop.f32.mrb[0].mxu0
        %v1202 = vadd.f32 %v977, %v1201
        %v1203 = vpop.f32.mrb[0].mxu0
        %1204 = vmatprep.mubr.f32.mxu0 %v273
        %1205 = vmatmul.mubr.f32.gmra.mrb[0].mxu0 %v272
        %v1206 = vpop.f32.mrb[0].mxu0
        %v1207 = vadd.f32 %v982, %v1206
        %v1208 = vpop.f32.mrb[0].mxu0
        %1209 = vmatprep.mubr.f32.mxu0 %v280
        %1210 = vmatmul.mubr.f32.gmra.mrb[0].mxu0 %v279
        %v1211 = vpop.f32.mrb[0].mxu0
        %v1212 = vadd.f32 %v987, %v1211
        %v1213 = vpop.f32.mrb[0].mxu0
        %1214 = vmatprep.mubr.f32.mxu0 %v287
        %1215 = vmatmul.mubr.f32.gmra.mrb[0].mxu0 %v286
        %v1216 = vpop.f32.mrb[0].mxu0
        %v1217 = vadd.f32 %v992, %v1216
        %v1218 = vpop.f32.mrb[0].mxu0
        %1219 = vmatprep.mubr.f32.mxu0 %v294
        %1220 = vmatmul.mubr.f32.gmra.mrb[0].mxu0 %v293
        %v1221 = vpop.f32.mrb[0].mxu0
        %v1222 = vadd.f32 %v997, %v1221
        %v1223 = vpop.f32.mrb[0].mxu0
        %1224 = vmatprep.mubr.f32.mxu0 %v301
        %1225 = vmatmul.mubr.f32.gmra.mrb[0].mxu0 %v300
        %v1226 = vpop.f32.mrb[0].mxu0
        %v1227 = vadd.f32 %v1002, %v1226
        %v1228 = vpop.f32.mrb[0].mxu0
        %1229 = vmatprep.mubr.f32.mxu0 %v308
        %1230 = vmatmul.mubr.f32.gmra.mrb[0].mxu0 %v307
        %v1231 = vpop.f32.mrb[0].mxu0
        %v1232 = vadd.f32 %v1007, %v1231
        %v1233 = vpop.f32.mrb[0].mxu0
        %1234 = vmatprep.mubr.f32.mxu0 %v315
        %1235 = vmatmul.mubr.f32.gmra.mrb[0].mxu0 %v314
        %v1236 = vpop.f32.mrb[0].mxu0
        %v1237 = vadd.f32 %v1012, %v1236
        %v1238 = vpop.f32.mrb[0].mxu0
        %1239 = vmatprep.mubr.f32.mxu0 %v322
        %1240 = vmatmul.mubr.f32.gmra.mrb[0].mxu0 %v321
        %v1241 = vpop.f32.mrb[0].mxu0
        %v1242 = vadd.f32 %v1017, %v1241
        %v1243 = vpop.f32.mrb[0].mxu0
        %1244 = vmatprep.mubr.f32.mxu0 %v329
        %1245 = vmatmul.mubr.f32.gmra.mrb[0].mxu0 %v328
        %v1246 = vpop.f32.mrb[0].mxu0
        %v1247 = vadd.f32 %v1022, %v1246
        %v1248 = vpop.f32.mrb[0].mxu0
        %1249 = vmatprep.mubr.f32.mxu0 %v336
        %1250 = vmatmul.mubr.f32.gmra.mrb[0].mxu0 %v335
        %v1251 = vpop.f32.mrb[0].mxu0
        %v1252 = vadd.f32 %v1027, %v1251
        %v1253 = vpop.f32.mrb[0].mxu0
        %1254 = vmatprep.mubr.f32.mxu0 %v343
        %1255 = vmatmul.mubr.f32.gmra.mrb[0].mxu0 %v342
        %v1256 = vpop.f32.mrb[0].mxu0
        %v1257 = vadd.f32 %v1032, %v1256
        %v1258 = vpop.f32.mrb[0].mxu0
        %1259 = vmatprep.mubr.f32.mxu0 %v350
        %1260 = vmatmul.mubr.f32.gmra.mrb[0].mxu0 %v349
        %v1261 = vpop.f32.mrb[0].mxu0
        %v1262 = vadd.f32 %v1037, %v1261
        %v1263 = vpop.f32.mrb[0].mxu0
        %1264 = vmatprep.mubr.f32.mxu0 %v357
        %1265 = vmatmul.mubr.f32.gmra.mrb[0].mxu0 %v356
        %v1266 = vpop.f32.mrb[0].mxu0
        %v1267 = vadd.f32 %v1042, %v1266
        %v1268 = vpop.f32.mrb[0].mxu0
        %1269 = vmatprep.mubr.f32.mxu0 %v364
        %1270 = vmatmul.mubr.f32.gmra.mrb[0].mxu0 %v363
        %v1271 = vpop.f32.mrb[0].mxu0
        %v1272 = vadd.f32 %v1047, %v1271
        %v1273 = vpop.f32.mrb[0].mxu0
        %1274 = vmatprep.mubr.f32.mxu0 %v371
        %1275 = vmatmul.mubr.f32.gmra.mrb[0].mxu0 %v370
        %v1276 = vpop.f32.mrb[0].mxu0
        %v1277 = vadd.f32 %v1052, %v1276
        %v1278 = vpop.f32.mrb[0].mxu0
        %1279 = vmatprep.mubr.f32.mxu0 %v378
        %1280 = vmatmul.mubr.f32.gmra.mrb[0].mxu0 %v377
        %v1281 = vpop.f32.mrb[0].mxu0
        %v1282 = vadd.f32 %v1057, %v1281
        %v1283 = vpop.f32.mrb[0].mxu0
        %1284 = vmatprep.mubr.f32.mxu0 %v385
        %1285 = vmatmul.mubr.f32.gmra.mrb[0].mxu0 %v384
        %v1286 = vpop.f32.mrb[0].mxu0
        %v1287 = vadd.f32 %v1062, %v1286
        %v1288 = vpop.f32.mrb[0].mxu0
        %1289 = vmatprep.mubr.f32.mxu0 %v392
        %1290 = vmatmul.mubr.f32.gmra.mrb[0].mxu0 %v391
        %v1291 = vpop.f32.mrb[0].mxu0
        %v1292 = vadd.f32 %v1067, %v1291
        %v1293 = vpop.f32.mrb[0].mxu0
        %1294 = vmatprep.mubr.f32.mxu0 %v399
        %1295 = vmatmul.mubr.f32.gmra.mrb[0].mxu0 %v398
        %v1296 = vpop.f32.mrb[0].mxu0
        %v1297 = vadd.f32 %v1072, %v1296
        %v1298 = vpop.f32.mrb[0].mxu0
        %1299 = vmatprep.mubr.f32.mxu0 %v406
        %1300 = vmatmul.mubr.f32.gmra.mrb[0].mxu0 %v405
        %v1301 = vpop.f32.mrb[0].mxu0
        %v1302 = vadd.f32 %v1077, %v1301
        %v1303 = vpop.f32.mrb[0].mxu0
        %1304 = vmatprep.mubr.f32.mxu0 %v413
        %1305 = vmatmul.mubr.f32.gmra.mrb[0].mxu0 %v412
        %v1306 = vpop.f32.mrb[0].mxu0
        %v1307 = vadd.f32 %v1082, %v1306
        %v1308 = vpop.f32.mrb[0].mxu0
        %1309 = vmatprep.mubr.f32.mxu0 %v420
        %1310 = vmatmul.mubr.f32.gmra.mrb[0].mxu0 %v419
        %v1311 = vpop.f32.mrb[0].mxu0
        %v1312 = vadd.f32 %v1087, %v1311
        %v1313 = vpop.f32.mrb[0].mxu0
        %1314 = vmatprep.mubr.f32.mxu0 %v427
        %1315 = vmatmul.mubr.f32.gmra.mrb[0].mxu0 %v426
        %v1316 = vpop.f32.mrb[0].mxu0
        %v1317 = vadd.f32 %v1092, %v1316
        %v1318 = vpop.f32.mrb[0].mxu0
        %1319 = vmatprep.mubr.f32.mxu0 %v434
        %1320 = vmatmul.mubr.f32.gmra.mrb[0].mxu0 %v433
        %v1321 = vpop.f32.mrb[0].mxu0
        %v1322 = vadd.f32 %v1097, %v1321
        %v1323 = vpop.f32.mrb[0].mxu0
        %1324 = vmatprep.mubr.f32.mxu0 %v441
        %1325 = vmatmul.mubr.f32.gmra.mrb[0].mxu0 %v440
        %v1326 = vpop.f32.mrb[0].mxu0
        %v1327 = vadd.f32 %v1102, %v1326
        %v1328 = vpop.f32.mrb[0].mxu0
        %1329 = vmatprep.mubr.f32.mxu0 %v448
        %1330 = vmatmul.mubr.f32.gmra.mrb[0].mxu0 %v447
        %v1331 = vpop.f32.mrb[0].mxu0
        %v1332 = vadd.f32 %v1107, %v1331
        %v1333 = vpop.f32.mrb[0].mxu0
        %1334 = vmatprep.mubr.f32.mxu0 %v455
        %1335 = vmatmul.mubr.f32.gmra.mrb[0].mxu0 %v454
        %v1336 = vpop.f32.mrb[0].mxu0
        %v1337 = vadd.f32 %v1112, %v1336
        %v1338 = vpop.f32.mrb[0].mxu0
        %1339 = vmatprep.mubr.f32.mxu0 %v462
        %1340 = vmatmul.mubr.f32.gmra.mrb[0].mxu0 %v461
        %v1341 = vpop.f32.mrb[0].mxu0
        %v1342 = vadd.f32 %v1117, %v1341
        %v1343 = vpop.f32.mrb[0].mxu0
        %1344 = vmatprep.mubr.f32.mxu0 %v469
        %1345 = vmatmul.mubr.f32.gmra.mrb[0].mxu0 %v468
        %v1346 = vpop.f32.mrb[0].mxu0
        %v1347 = vadd.f32 %v1122, %v1346
        %v1348 = vpop.f32.mrb[0].mxu0
        %1349 = vmatprep.mubr.f32.mxu0 %v476
        %1350 = vmatmul.mubr.f32.gmra.mrb[0].mxu0 %v475
        %v1351 = vpop.f32.mrb[0].mxu0
        %v1352 = vadd.f32 %v1127, %v1351
        %v1353 = vpop.f32.mrb[0].mxu0
        %1354 = vdwg.mxu0
        %1355 = vmatprep.subr.mxu0 0.0
        %1356 = vmatpush1.msra.mxu0 %v574
        %1357 = vmatprep.subr.mxu0 0.0
        %1358 = vmatpush1.msra.mxu0 %v575
        %1359 = vmatprep.subr.mxu0 0.0
        %1360 = vmatpush1.msra.mxu0 0.0
        %1361 = vmatprep.subr.mxu0 0.0
        %1362 = vmatpush1.msra.mxu0 0.0
        %1363 = vmatprep.subr.mxu0 0.0
        %1364 = vmatpush1.msra.mxu0 0.0
        %1365 = vmatprep.subr.mxu0 0.0
        %1366 = vmatpush1.msra.mxu0 0.0
        %1367 = vmatprep.subr.mxu0 0.0
        %1368 = vmatpush1.msra.mxu0 0.0
        %1369 = vmatprep.subr.mxu0 0.0
        %1370 = vmatpush1.msra.mxu0 0.0
        %1371 = vmatprep.subr.mxu0 0.0
        %1372 = vmatpush1.msra.mxu0 0.0
        %1373 = vmatprep.subr.mxu0 0.0
        %1374 = vmatpush1.msra.mxu0 0.0
        %1375 = vmatprep.subr.mxu0 0.0
        %1376 = vmatpush1.msra.mxu0 0.0
        %1377 = vmatprep.subr.mxu0 0.0
        %1378 = vmatpush1.msra.mxu0 0.0
        %1379 = vmatprep.subr.mxu0 0.0
        %1380 = vmatpush1.msra.mxu0 0.0
        %1381 = vmatprep.subr.mxu0 0.0
        %1382 = vmatpush1.msra.mxu0 0.0
        %1383 = vmatprep.subr.mxu0 0.0
        %1384 = vmatpush1.msra.mxu0 0.0
        %1385 = vmatprep.subr.mxu0 0.0
        %1386 = vmatpush1.msra.mxu0 0.0
        %1387 = vmatprep.subr.mxu0 0.0
        %1388 = vmatpush1.msra.mxu0 0.0
        %1389 = vmatprep.subr.mxu0 0.0
        %1390 = vmatpush1.msra.mxu0 0.0
        %1391 = vmatprep.subr.mxu0 0.0
        %1392 = vmatpush1.msra.mxu0 0.0
        %1393 = vmatprep.subr.mxu0 0.0
        %1394 = vmatpush1.msra.mxu0 0.0
        %1395 = vmatprep.subr.mxu0 0.0
        %1396 = vmatpush1.msra.mxu0 0.0
        %1397 = vmatprep.subr.mxu0 0.0
        %1398 = vmatpush1.msra.mxu0 0.0
        %1399 = vmatprep.subr.mxu0 0.0
        %1400 = vmatpush1.msra.mxu0 0.0
        %1401 = vmatprep.subr.mxu0 0.0
        %1402 = vmatpush1.msra.mxu0 0.0
        %1403 = vmatprep.subr.mxu0 0.0
        %1404 = vmatpush1.msra.mxu0 0.0
        %1405 = vmatprep.subr.mxu0 0.0
        %1406 = vmatpush1.msra.mxu0 0.0
        %1407 = vmatprep.subr.mxu0 0.0
        %1408 = vmatpush1.msra.mxu0 0.0
        %1409 = vmatprep.subr.mxu0 0.0
        %1410 = vmatpush1.msra.mxu0 0.0
        %1411 = vmatprep.subr.mxu0 0.0
        %1412 = vmatpush1.msra.mxu0 0.0
        %1413 = vmatprep.subr.mxu0 0.0
        %1414 = vmatpush1.msra.mxu0 0.0
        %1415 = vmatprep.subr.mxu0 0.0
        %1416 = vmatpush1.msra.mxu0 0.0
        %1417 = vmatprep.subr.mxu0 0.0
        %1418 = vmatpush1.msra.mxu0 0.0
        %1419 = vmatprep.mubr.f32.mxu0 0.0
        %1420 = vmatmul.mubr.f32.gmra.mrb[0].mxu0 %v585
        %v1421 = vpop.f32.mrb[0].mxu0
        %v1422 = vadd.f32 %v1197, %v1421
        %v1423 = vpop.f32.mrb[0].mxu0
        %1424 = vmatprep.mubr.f32.mxu0 0.0
        %1425 = vmatmul.mubr.f32.gmra.mrb[0].mxu0 %v588
        %v1426 = vpop.f32.mrb[0].mxu0
        %v1427 = vadd.f32 %v1202, %v1426
        %v1428 = vpop.f32.mrb[0].mxu0
        %1429 = vmatprep.mubr.f32.mxu0 0.0
        %1430 = vmatmul.mubr.f32.gmra.mrb[0].mxu0 %v591
        %v1431 = vpop.f32.mrb[0].mxu0
        %v1432 = vadd.f32 %v1207, %v1431
        %v1433 = vpop.f32.mrb[0].mxu0
        %1434 = vmatprep.mubr.f32.mxu0 0.0
        %1435 = vmatmul.mubr.f32.gmra.mrb[0].mxu0 %v594
        %v1436 = vpop.f32.mrb[0].mxu0
        %v1437 = vadd.f32 %v1212, %v1436
        %v1438 = vpop.f32.mrb[0].mxu0
        %1439 = vmatprep.mubr.f32.mxu0 0.0
        %1440 = vmatmul.mubr.f32.gmra.mrb[0].mxu0 %v597
        %v1441 = vpop.f32.mrb[0].mxu0
        %v1442 = vadd.f32 %v1217, %v1441
        %v1443 = vpop.f32.mrb[0].mxu0
        %1444 = vmatprep.mubr.f32.mxu0 0.0
        %1445 = vmatmul.mubr.f32.gmra.mrb[0].mxu0 %v600
        %v1446 = vpop.f32.mrb[0].mxu0
        %v1447 = vadd.f32 %v1222, %v1446
        %v1448 = vpop.f32.mrb[0].mxu0
        %1449 = vmatprep.mubr.f32.mxu0 0.0
        %1450 = vmatmul.mubr.f32.gmra.mrb[0].mxu0 %v603
        %v1451 = vpop.f32.mrb[0].mxu0
        %v1452 = vadd.f32 %v1227, %v1451
        %v1453 = vpop.f32.mrb[0].mxu0
        %1454 = vmatprep.mubr.f32.mxu0 0.0
        %1455 = vmatmul.mubr.f32.gmra.mrb[0].mxu0 %v606
        %v1456 = vpop.f32.mrb[0].mxu0
        %v1457 = vadd.f32 %v1232, %v1456
        %v1458 = vpop.f32.mrb[0].mxu0
        %1459 = vmatprep.mubr.f32.mxu0 0.0
        %1460 = vmatmul.mubr.f32.gmra.mrb[0].mxu0 %v609
        %v1461 = vpop.f32.mrb[0].mxu0
        %v1462 = vadd.f32 %v1237, %v1461
        %v1463 = vpop.f32.mrb[0].mxu0
        %1464 = vmatprep.mubr.f32.mxu0 0.0
        %1465 = vmatmul.mubr.f32.gmra.mrb[0].mxu0 %v612
        %v1466 = vpop.f32.mrb[0].mxu0
        %v1467 = vadd.f32 %v1242, %v1466
        %v1468 = vpop.f32.mrb[0].mxu0
        %1469 = vmatprep.mubr.f32.mxu0 0.0
        %1470 = vmatmul.mubr.f32.gmra.mrb[0].mxu0 %v615
        %v1471 = vpop.f32.mrb[0].mxu0
        %v1472 = vadd.f32 %v1247, %v1471
        %v1473 = vpop.f32.mrb[0].mxu0
        %1474 = vmatprep.mubr.f32.mxu0 0.0
        %1475 = vmatmul.mubr.f32.gmra.mrb[0].mxu0 %v618
        %v1476 = vpop.f32.mrb[0].mxu0
        %v1477 = vadd.f32 %v1252, %v1476
        %v1478 = vpop.f32.mrb[0].mxu0
        %1479 = vmatprep.mubr.f32.mxu0 0.0
        %1480 = vmatmul.mubr.f32.gmra.mrb[0].mxu0 %v621
        %v1481 = vpop.f32.mrb[0].mxu0
        %v1482 = vadd.f32 %v1257, %v1481
        %v1483 = vpop.f32.mrb[0].mxu0
        %1484 = vmatprep.mubr.f32.mxu0 0.0
        %1485 = vmatmul.mubr.f32.gmra.mrb[0].mxu0 %v624
        %v1486 = vpop.f32.mrb[0].mxu0
        %v1487 = vadd.f32 %v1262, %v1486
        %v1488 = vpop.f32.mrb[0].mxu0
        %1489 = vmatprep.mubr.f32.mxu0 0.0
        %1490 = vmatmul.mubr.f32.gmra.mrb[0].mxu0 %v627
        %v1491 = vpop.f32.mrb[0].mxu0
        %v1492 = vadd.f32 %v1267, %v1491
        %v1493 = vpop.f32.mrb[0].mxu0
        %1494 = vmatprep.mubr.f32.mxu0 0.0
        %1495 = vmatmul.mubr.f32.gmra.mrb[0].mxu0 %v630
        %v1496 = vpop.f32.mrb[0].mxu0
        %v1497 = vadd.f32 %v1272, %v1496
        %v1498 = vpop.f32.mrb[0].mxu0
        %1499 = vmatprep.mubr.f32.mxu0 0.0
        %1500 = vmatmul.mubr.f32.gmra.mrb[0].mxu0 %v633
        %v1501 = vpop.f32.mrb[0].mxu0
        %v1502 = vadd.f32 %v1277, %v1501
        %v1503 = vpop.f32.mrb[0].mxu0
        %1504 = vmatprep.mubr.f32.mxu0 0.0
        %1505 = vmatmul.mubr.f32.gmra.mrb[0].mxu0 %v636
        %v1506 = vpop.f32.mrb[0].mxu0
        %v1507 = vadd.f32 %v1282, %v1506
        %v1508 = vpop.f32.mrb[0].mxu0
        %1509 = vmatprep.mubr.f32.mxu0 0.0
        %1510 = vmatmul.mubr.f32.gmra.mrb[0].mxu0 %v639
        %v1511 = vpop.f32.mrb[0].mxu0
        %v1512 = vadd.f32 %v1287, %v1511
        %v1513 = vpop.f32.mrb[0].mxu0
        %1514 = vmatprep.mubr.f32.mxu0 0.0
        %1515 = vmatmul.mubr.f32.gmra.mrb[0].mxu0 %v642
        %v1516 = vpop.f32.mrb[0].mxu0
        %v1517 = vadd.f32 %v1292, %v1516
        %v1518 = vpop.f32.mrb[0].mxu0
        %1519 = vmatprep.mubr.f32.mxu0 0.0
        %1520 = vmatmul.mubr.f32.gmra.mrb[0].mxu0 %v645
        %v1521 = vpop.f32.mrb[0].mxu0
        %v1522 = vadd.f32 %v1297, %v1521
        %v1523 = vpop.f32.mrb[0].mxu0
        %1524 = vmatprep.mubr.f32.mxu0 0.0
        %1525 = vmatmul.mubr.f32.gmra.mrb[0].mxu0 %v648
        %v1526 = vpop.f32.mrb[0].mxu0
        %v1527 = vadd.f32 %v1302, %v1526
        %v1528 = vpop.f32.mrb[0].mxu0
        %1529 = vmatprep.mubr.f32.mxu0 0.0
        %1530 = vmatmul.mubr.f32.gmra.mrb[0].mxu0 %v651
        %v1531 = vpop.f32.mrb[0].mxu0
        %v1532 = vadd.f32 %v1307, %v1531
        %v1533 = vpop.f32.mrb[0].mxu0
        %1534 = vmatprep.mubr.f32.mxu0 0.0
        %1535 = vmatmul.mubr.f32.gmra.mrb[0].mxu0 %v654
        %v1536 = vpop.f32.mrb[0].mxu0
        %v1537 = vadd.f32 %v1312, %v1536
        %v1538 = vpop.f32.mrb[0].mxu0
        %1539 = vmatprep.mubr.f32.mxu0 0.0
        %1540 = vmatmul.mubr.f32.gmra.mrb[0].mxu0 %v657
        %v1541 = vpop.f32.mrb[0].mxu0
        %v1542 = vadd.f32 %v1317, %v1541
        %v1543 = vpop.f32.mrb[0].mxu0
        %1544 = vmatprep.mubr.f32.mxu0 0.0
        %1545 = vmatmul.mubr.f32.gmra.mrb[0].mxu0 %v660
        %v1546 = vpop.f32.mrb[0].mxu0
        %v1547 = vadd.f32 %v1322, %v1546
        %v1548 = vpop.f32.mrb[0].mxu0
        %1549 = vmatprep.mubr.f32.mxu0 0.0
        %1550 = vmatmul.mubr.f32.gmra.mrb[0].mxu0 %v663
        %v1551 = vpop.f32.mrb[0].mxu0
        %v1552 = vadd.f32 %v1327, %v1551
        %v1553 = vpop.f32.mrb[0].mxu0
        %1554 = vmatprep.mubr.f32.mxu0 0.0
        %1555 = vmatmul.mubr.f32.gmra.mrb[0].mxu0 %v666
        %v1556 = vpop.f32.mrb[0].mxu0
        %v1557 = vadd.f32 %v1332, %v1556
        %v1558 = vpop.f32.mrb[0].mxu0
        %1559 = vmatprep.mubr.f32.mxu0 0.0
        %1560 = vmatmul.mubr.f32.gmra.mrb[0].mxu0 %v669
        %v1561 = vpop.f32.mrb[0].mxu0
        %v1562 = vadd.f32 %v1337, %v1561
        %v1563 = vpop.f32.mrb[0].mxu0
        %1564 = vmatprep.mubr.f32.mxu0 0.0
        %1565 = vmatmul.mubr.f32.gmra.mrb[0].mxu0 %v672
        %v1566 = vpop.f32.mrb[0].mxu0
        %v1567 = vadd.f32 %v1342, %v1566
        %v1568 = vpop.f32.mrb[0].mxu0
        %1569 = vmatprep.mubr.f32.mxu0 0.0
        %1570 = vmatmul.mubr.f32.gmra.mrb[0].mxu0 %v675
        %v1571 = vpop.f32.mrb[0].mxu0
        %v1572 = vadd.f32 %v1347, %v1571
        %v1573 = vpop.f32.mrb[0].mxu0
        %1574 = vmatprep.mubr.f32.mxu0 0.0
        %1575 = vmatmul.mubr.f32.gmra.mrb[0].mxu0 %v678
        %v1576 = vpop.f32.mrb[0].mxu0
        %v1577 = vadd.f32 %v1352, %v1576
        %v1578 = vpop.f32.mrb[0].mxu0
        %1579 = vdwg.mxu0
        %v1580 = vmax.f32 %v1422, 0.0
        %v1581 = vmax.f32 %v1427, 0.0
        %v1582 = vmax.f32 %v1432, 0.0
        %v1583 = vmax.f32 %v1437, 0.0
        %v1584 = vmax.f32 %v1442, 0.0
        %v1585 = vmax.f32 %v1447, 0.0
        %v1586 = vmax.f32 %v1452, 0.0
        %v1587 = vmax.f32 %v1457, 0.0
        %v1588 = vmax.f32 %v1462, 0.0
        %v1589 = vmax.f32 %v1467, 0.0
        %v1590 = vmax.f32 %v1472, 0.0
        %v1591 = vmax.f32 %v1477, 0.0
        %v1592 = vmax.f32 %v1482, 0.0
        %v1593 = vmax.f32 %v1487, 0.0
        %v1594 = vmax.f32 %v1492, 0.0
        %v1595 = vmax.f32 %v1497, 0.0
        %v1596 = vmax.f32 %v1502, 0.0
        %v1597 = vmax.f32 %v1507, 0.0
        %v1598 = vmax.f32 %v1512, 0.0
        %v1599 = vmax.f32 %v1517, 0.0
        %v1600 = vmax.f32 %v1522, 0.0
        %v1601 = vmax.f32 %v1527, 0.0
        %v1602 = vmax.f32 %v1532, 0.0
        %v1603 = vmax.f32 %v1537, 0.0
        %v1604 = vmax.f32 %v1542, 0.0
        %v1605 = vmax.f32 %v1547, 0.0
        %v1606 = vmax.f32 %v1552, 0.0
        %v1607 = vmax.f32 %v1557, 0.0
        %v1608 = vmax.f32 %v1562, 0.0
        %v1609 = vmax.f32 %v1567, 0.0
        %v1610 = vmax.f32 %v1572, 0.0
        %v1611 = vmax.f32 %v1577, 0.0
        %v1612 = vld [vmem:[%s3] sm:$0xff]
        %v1613 = vld [vmem:[%s3 + $0x8] sm:$0xff]
        %v1614 = vld [vmem:[%s3 + $0x10] sm:$0xff]
        %v1615 = vld [vmem:[%s3 + $0x18] sm:$0xff]
        %v1616 = vld [vmem:[%s3 + $0x20] sm:$0xff]
        %v1617 = vld [vmem:[%s3 + $0x28] sm:$0xff]
        %v1618 = vld [vmem:[%s3 + $0x30] sm:$0xff]
        %v1619 = vld [vmem:[%s3 + $0x38] sm:$0xff]
        %v1620 = vld [vmem:[%s3 + $0x40] sm:$0xff]
        %v1621 = vld [vmem:[%s3 + $0x48] sm:$0xff]
        %v1622 = vld [vmem:[%s3 + $0x50] sm:$0xff]
        %v1623 = vld [vmem:[%s3 + $0x58] sm:$0xff]
        %v1624 = vld [vmem:[%s3 + $0x60] sm:$0xff]
        %v1625 = vld [vmem:[%s3 + $0x68] sm:$0xff]
        %v1626 = vld [vmem:[%s3 + $0x70] sm:$0xff]
        %v1627 = vld [vmem:[%s3 + $0x78] sm:$0xff]
        %v1628 = vld [vmem:[%s4] sm:$0x1]
        %v1630 = vlaneseq
        %v1631 = vshrl.u32 %v1630, 7
        %v1632 = vsub.s32 0, %v1631
        %v1633 = vrot.slane %v1628, %v1632
        %1635 = vmatprep.subr.mxu0 0.0
        %1636 = vmatpush1.msra.mxu0 %v1612
        %1637 = vmatprep.subr.mxu0 0.0
        %1638 = vmatpush1.msra.mxu0 %v1613
        %1639 = vmatprep.subr.mxu0 0.0
        %1640 = vmatpush1.msra.mxu0 %v1614
        %1641 = vmatprep.subr.mxu0 0.0
        %1642 = vmatpush1.msra.mxu0 %v1615
        %1643 = vmatprep.subr.mxu0 0.0
        %1644 = vmatpush1.msra.mxu0 %v1616
        %1645 = vmatprep.subr.mxu0 0.0
        %1646 = vmatpush1.msra.mxu0 %v1617
        %1647 = vmatprep.subr.mxu0 0.0
        %1648 = vmatpush1.msra.mxu0 %v1618
        %1649 = vmatprep.subr.mxu0 0.0
        %1650 = vmatpush1.msra.mxu0 %v1619
        %1651 = vmatprep.subr.mxu0 0.0
        %1652 = vmatpush1.msra.mxu0 %v1620
        %1653 = vmatprep.subr.mxu0 0.0
        %1654 = vmatpush1.msra.mxu0 %v1621
        %1655 = vmatprep.subr.mxu0 0.0
        %1656 = vmatpush1.msra.mxu0 %v1622
        %1657 = vmatprep.subr.mxu0 0.0
        %1658 = vmatpush1.msra.mxu0 %v1623
        %1659 = vmatprep.subr.mxu0 0.0
        %1660 = vmatpush1.msra.mxu0 %v1624
        %1661 = vmatprep.subr.mxu0 0.0
        %1662 = vmatpush1.msra.mxu0 %v1625
        %1663 = vmatprep.subr.mxu0 0.0
        %1664 = vmatpush1.msra.mxu0 %v1626
        %1665 = vmatprep.subr.mxu0 0.0
        %1666 = vmatpush1.msra.mxu0 %v1627
        %1667 = vmatprep.subr.mxu0 0.0
        %1668 = vmatpush1.msra.mxu0 0.0
        %1669 = vmatprep.subr.mxu0 0.0
        %1670 = vmatpush1.msra.mxu0 0.0
        %1671 = vmatprep.subr.mxu0 0.0
        %1672 = vmatpush1.msra.mxu0 0.0
        %1673 = vmatprep.subr.mxu0 0.0
        %1674 = vmatpush1.msra.mxu0 0.0
        %1675 = vmatprep.subr.mxu0 0.0
        %1676 = vmatpush1.msra.mxu0 0.0
        %1677 = vmatprep.subr.mxu0 0.0
        %1678 = vmatpush1.msra.mxu0 0.0
        %1679 = vmatprep.subr.mxu0 0.0
        %1680 = vmatpush1.msra.mxu0 0.0
        %1681 = vmatprep.subr.mxu0 0.0
        %1682 = vmatpush1.msra.mxu0 0.0
        %1683 = vmatprep.subr.mxu0 0.0
        %1684 = vmatpush1.msra.mxu0 0.0
        %1685 = vmatprep.subr.mxu0 0.0
        %1686 = vmatpush1.msra.mxu0 0.0
        %1687 = vmatprep.subr.mxu0 0.0
        %1688 = vmatpush1.msra.mxu0 0.0
        %1689 = vmatprep.subr.mxu0 0.0
        %1690 = vmatpush1.msra.mxu0 0.0
        %1691 = vmatprep.subr.mxu0 0.0
        %1692 = vmatpush1.msra.mxu0 0.0
        %1693 = vmatprep.subr.mxu0 0.0
        %1694 = vmatpush1.msra.mxu0 0.0
        %1695 = vmatprep.subr.mxu0 0.0
        %1696 = vmatpush1.msra.mxu0 0.0
        %1697 = vmatprep.subr.mxu0 0.0
        %1698 = vmatpush1.msra.mxu0 0.0
        %1699 = vmatprep.mubr.f32.mxu0 0.0
        %1700 = vmatmul.mubr.f32.gmra.mrb[0].mxu0 %v1580
        %v1701 = vpop.f32.mrb[0].mxu0
        %v1702 = vadd.f32 %v1633, %v1701
        %v1703 = vpop.f32.mrb[0].mxu0
        %1704 = vmatprep.mubr.f32.mxu0 0.0
        %1705 = vmatmul.mubr.f32.gmra.mrb[0].mxu0 %v1581
        %v1706 = vpop.f32.mrb[0].mxu0
        %v1707 = vadd.f32 %v1633, %v1706
        %v1708 = vpop.f32.mrb[0].mxu0
        %1709 = vmatprep.mubr.f32.mxu0 0.0
        %1710 = vmatmul.mubr.f32.gmra.mrb[0].mxu0 %v1582
        %v1711 = vpop.f32.mrb[0].mxu0
        %v1712 = vadd.f32 %v1633, %v1711
        %v1713 = vpop.f32.mrb[0].mxu0
        %1714 = vmatprep.mubr.f32.mxu0 0.0
        %1715 = vmatmul.mubr.f32.gmra.mrb[0].mxu0 %v1583
        %v1716 = vpop.f32.mrb[0].mxu0
        %v1717 = vadd.f32 %v1633, %v1716
        %v1718 = vpop.f32.mrb[0].mxu0
        %1719 = vmatprep.mubr.f32.mxu0 0.0
        %1720 = vmatmul.mubr.f32.gmra.mrb[0].mxu0 %v1584
        %v1721 = vpop.f32.mrb[0].mxu0
        %v1722 = vadd.f32 %v1633, %v1721
        %v1723 = vpop.f32.mrb[0].mxu0
        %1724 = vmatprep.mubr.f32.mxu0 0.0
        %1725 = vmatmul.mubr.f32.gmra.mrb[0].mxu0 %v1585
        %v1726 = vpop.f32.mrb[0].mxu0
        %v1727 = vadd.f32 %v1633, %v1726
        %v1728 = vpop.f32.mrb[0].mxu0
        %1729 = vmatprep.mubr.f32.mxu0 0.0
        %1730 = vmatmul.mubr.f32.gmra.mrb[0].mxu0 %v1586
        %v1731 = vpop.f32.mrb[0].mxu0
        %v1732 = vadd.f32 %v1633, %v1731
        %v1733 = vpop.f32.mrb[0].mxu0
        %1734 = vmatprep.mubr.f32.mxu0 0.0
        %1735 = vmatmul.mubr.f32.gmra.mrb[0].mxu0 %v1587
        %v1736 = vpop.f32.mrb[0].mxu0
        %v1737 = vadd.f32 %v1633, %v1736
        %v1738 = vpop.f32.mrb[0].mxu0
        %1739 = vmatprep.mubr.f32.mxu0 0.0
        %1740 = vmatmul.mubr.f32.gmra.mrb[0].mxu0 %v1588
        %v1741 = vpop.f32.mrb[0].mxu0
        %v1742 = vadd.f32 %v1633, %v1741
        %v1743 = vpop.f32.mrb[0].mxu0
        %1744 = vmatprep.mubr.f32.mxu0 0.0
        %1745 = vmatmul.mubr.f32.gmra.mrb[0].mxu0 %v1589
        %v1746 = vpop.f32.mrb[0].mxu0
        %v1747 = vadd.f32 %v1633, %v1746
        %v1748 = vpop.f32.mrb[0].mxu0
        %1749 = vmatprep.mubr.f32.mxu0 0.0
        %1750 = vmatmul.mubr.f32.gmra.mrb[0].mxu0 %v1590
        %v1751 = vpop.f32.mrb[0].mxu0
        %v1752 = vadd.f32 %v1633, %v1751
        %v1753 = vpop.f32.mrb[0].mxu0
        %1754 = vmatprep.mubr.f32.mxu0 0.0
        %1755 = vmatmul.mubr.f32.gmra.mrb[0].mxu0 %v1591
        %v1756 = vpop.f32.mrb[0].mxu0
        %v1757 = vadd.f32 %v1633, %v1756
        %v1758 = vpop.f32.mrb[0].mxu0
        %1759 = vmatprep.mubr.f32.mxu0 0.0
        %1760 = vmatmul.mubr.f32.gmra.mrb[0].mxu0 %v1592
        %v1761 = vpop.f32.mrb[0].mxu0
        %v1762 = vadd.f32 %v1633, %v1761
        %v1763 = vpop.f32.mrb[0].mxu0
        %1764 = vmatprep.mubr.f32.mxu0 0.0
        %1765 = vmatmul.mubr.f32.gmra.mrb[0].mxu0 %v1593
        %v1766 = vpop.f32.mrb[0].mxu0
        %v1767 = vadd.f32 %v1633, %v1766
        %v1768 = vpop.f32.mrb[0].mxu0
        %1769 = vmatprep.mubr.f32.mxu0 0.0
        %1770 = vmatmul.mubr.f32.gmra.mrb[0].mxu0 %v1594
        %v1771 = vpop.f32.mrb[0].mxu0
        %v1772 = vadd.f32 %v1633, %v1771
        %v1773 = vpop.f32.mrb[0].mxu0
        %1774 = vmatprep.mubr.f32.mxu0 0.0
        %1775 = vmatmul.mubr.f32.gmra.mrb[0].mxu0 %v1595
        %v1776 = vpop.f32.mrb[0].mxu0
        %v1777 = vadd.f32 %v1633, %v1776
        %v1778 = vpop.f32.mrb[0].mxu0
        %1779 = vmatprep.mubr.f32.mxu0 0.0
        %1780 = vmatmul.mubr.f32.gmra.mrb[0].mxu0 %v1596
        %v1781 = vpop.f32.mrb[0].mxu0
        %v1782 = vadd.f32 %v1633, %v1781
        %v1783 = vpop.f32.mrb[0].mxu0
        %1784 = vmatprep.mubr.f32.mxu0 0.0
        %1785 = vmatmul.mubr.f32.gmra.mrb[0].mxu0 %v1597
        %v1786 = vpop.f32.mrb[0].mxu0
        %v1787 = vadd.f32 %v1633, %v1786
        %v1788 = vpop.f32.mrb[0].mxu0
        %1789 = vmatprep.mubr.f32.mxu0 0.0
        %1790 = vmatmul.mubr.f32.gmra.mrb[0].mxu0 %v1598
        %v1791 = vpop.f32.mrb[0].mxu0
        %v1792 = vadd.f32 %v1633, %v1791
        %v1793 = vpop.f32.mrb[0].mxu0
        %1794 = vmatprep.mubr.f32.mxu0 0.0
        %1795 = vmatmul.mubr.f32.gmra.mrb[0].mxu0 %v1599
        %v1796 = vpop.f32.mrb[0].mxu0
        %v1797 = vadd.f32 %v1633, %v1796
        %v1798 = vpop.f32.mrb[0].mxu0
        %1799 = vmatprep.mubr.f32.mxu0 0.0
        %1800 = vmatmul.mubr.f32.gmra.mrb[0].mxu0 %v1600
        %v1801 = vpop.f32.mrb[0].mxu0
        %v1802 = vadd.f32 %v1633, %v1801
        %v1803 = vpop.f32.mrb[0].mxu0
        %1804 = vmatprep.mubr.f32.mxu0 0.0
        %1805 = vmatmul.mubr.f32.gmra.mrb[0].mxu0 %v1601
        %v1806 = vpop.f32.mrb[0].mxu0
        %v1807 = vadd.f32 %v1633, %v1806
        %v1808 = vpop.f32.mrb[0].mxu0
        %1809 = vmatprep.mubr.f32.mxu0 0.0
        %1810 = vmatmul.mubr.f32.gmra.mrb[0].mxu0 %v1602
        %v1811 = vpop.f32.mrb[0].mxu0
        %v1812 = vadd.f32 %v1633, %v1811
        %v1813 = vpop.f32.mrb[0].mxu0
        %1814 = vmatprep.mubr.f32.mxu0 0.0
        %1815 = vmatmul.mubr.f32.gmra.mrb[0].mxu0 %v1603
        %v1816 = vpop.f32.mrb[0].mxu0
        %v1817 = vadd.f32 %v1633, %v1816
        %v1818 = vpop.f32.mrb[0].mxu0
        %1819 = vmatprep.mubr.f32.mxu0 0.0
        %1820 = vmatmul.mubr.f32.gmra.mrb[0].mxu0 %v1604
        %v1821 = vpop.f32.mrb[0].mxu0
        %v1822 = vadd.f32 %v1633, %v1821
        %v1823 = vpop.f32.mrb[0].mxu0
        %1824 = vmatprep.mubr.f32.mxu0 0.0
        %1825 = vmatmul.mubr.f32.gmra.mrb[0].mxu0 %v1605
        %v1826 = vpop.f32.mrb[0].mxu0
        %v1827 = vadd.f32 %v1633, %v1826
        %v1828 = vpop.f32.mrb[0].mxu0
        %1829 = vmatprep.mubr.f32.mxu0 0.0
        %1830 = vmatmul.mubr.f32.gmra.mrb[0].mxu0 %v1606
        %v1831 = vpop.f32.mrb[0].mxu0
        %v1832 = vadd.f32 %v1633, %v1831
        %v1833 = vpop.f32.mrb[0].mxu0
        %1834 = vmatprep.mubr.f32.mxu0 0.0
        %1835 = vmatmul.mubr.f32.gmra.mrb[0].mxu0 %v1607
        %v1836 = vpop.f32.mrb[0].mxu0
        %v1837 = vadd.f32 %v1633, %v1836
        %v1838 = vpop.f32.mrb[0].mxu0
        %1839 = vmatprep.mubr.f32.mxu0 0.0
        %1840 = vmatmul.mubr.f32.gmra.mrb[0].mxu0 %v1608
        %v1841 = vpop.f32.mrb[0].mxu0
        %v1842 = vadd.f32 %v1633, %v1841
        %v1843 = vpop.f32.mrb[0].mxu0
        %1844 = vmatprep.mubr.f32.mxu0 0.0
        %1845 = vmatmul.mubr.f32.gmra.mrb[0].mxu0 %v1609
        %v1846 = vpop.f32.mrb[0].mxu0
        %v1847 = vadd.f32 %v1633, %v1846
        %v1848 = vpop.f32.mrb[0].mxu0
        %1849 = vmatprep.mubr.f32.mxu0 0.0
        %1850 = vmatmul.mubr.f32.gmra.mrb[0].mxu0 %v1610
        %v1851 = vpop.f32.mrb[0].mxu0
        %v1852 = vadd.f32 %v1633, %v1851
        %v1853 = vpop.f32.mrb[0].mxu0
        %1854 = vmatprep.mubr.f32.mxu0 0.0
        %1855 = vmatmul.mubr.f32.gmra.mrb[0].mxu0 %v1611
        %v1856 = vpop.f32.mrb[0].mxu0
        %v1857 = vadd.f32 %v1633, %v1856
        %v1858 = vpop.f32.mrb[0].mxu0
        %1859 = vdwg.mxu0
        %1860 = vst [vmem:[%s231] sm:$0xff] %v1702
        %1861 = vst [vmem:[%s231 + $0x8] sm:$0xff] %v1707
        %1862 = vst [vmem:[%s231 + $0x10] sm:$0xff] %v1712
        %1863 = vst [vmem:[%s231 + $0x18] sm:$0xff] %v1717
        %1864 = vst [vmem:[%s231 + $0x20] sm:$0xff] %v1722
        %1865 = vst [vmem:[%s231 + $0x28] sm:$0xff] %v1727
        %1866 = vst [vmem:[%s231 + $0x30] sm:$0xff] %v1732
        %1867 = vst [vmem:[%s231 + $0x38] sm:$0xff] %v1737
        %1868 = vst [vmem:[%s231 + $0x40] sm:$0xff] %v1742
        %1869 = vst [vmem:[%s231 + $0x48] sm:$0xff] %v1747
        %1870 = vst [vmem:[%s231 + $0x50] sm:$0xff] %v1752
        %1871 = vst [vmem:[%s231 + $0x58] sm:$0xff] %v1757
        %1872 = vst [vmem:[%s231 + $0x60] sm:$0xff] %v1762
        %1873 = vst [vmem:[%s231 + $0x68] sm:$0xff] %v1767
        %1874 = vst [vmem:[%s231 + $0x70] sm:$0xff] %v1772
        %1875 = vst [vmem:[%s231 + $0x78] sm:$0xff] %v1777
        %1876 = vst [vmem:[%s231 + $0x80] sm:$0xff] %v1782
        %1877 = vst [vmem:[%s231 + $0x88] sm:$0xff] %v1787
        %1878 = vst [vmem:[%s231 + $0x90] sm:$0xff] %v1792
        %1879 = vst [vmem:[%s231 + $0x98] sm:$0xff] %v1797
        %1880 = vst [vmem:[%s231 + $0xa0] sm:$0xff] %v1802
        %1881 = vst [vmem:[%s231 + $0xa8] sm:$0xff] %v1807
        %1882 = vst [vmem:[%s231 + $0xb0] sm:$0xff] %v1812
        %1883 = vst [vmem:[%s231 + $0xb8] sm:$0xff] %v1817
        %1884 = vst [vmem:[%s231 + $0xc0] sm:$0xff] %v1822
        %1885 = vst [vmem:[%s231 + $0xc8] sm:$0xff] %v1827
        %1886 = vst [vmem:[%s231 + $0xd0] sm:$0xff] %v1832
        %1887 = vst [vmem:[%s231 + $0xd8] sm:$0xff] %v1837
        %1888 = vst [vmem:[%s231 + $0xe0] sm:$0xff] %v1842
        %1889 = vst [vmem:[%s231 + $0xe8] sm:$0xff] %v1847
        %1890 = vst [vmem:[%s231 + $0xf0] sm:$0xff] %v1852
        %1891 = vst [vmem:[%s231 + $0xf8] sm:$0xff] %v1857
        %s1892 = sand.u32 %s134, 1
        %s1893 = sand.u32 %s134, 1
        %s1894 = smul.addr %s1893, 256
        %s1895 = scalar_lea.vmem [#allocation2], %s1894
        // Predicated region
        $region41: #{convnet_forward.1} parent=39 // pred_check
          %p1896 = pneg %p144
        $region42: #{convnet_forward.1} parent=39 // pred_check_branch
          %1898 = sbr.rel (%p1896) target = $region44
        $region43: #{convnet_forward.1} parent=39 // pred_region
          %s1899 = smul.u32 32, %s16
          %s1900 = ssub.s32 33, %s1899
          %p1901 = scmp.lt.s32.totalorder %s1900, 32
          %s1902 = scalar_select %p1901, %s1900, 32
          %s1903 = smul.u32 128, %s1902
          %p1904 = scmp.ne.s32.totalorder 0, %s1903
          %s1905 = smul.addr %s1899, 8
          %s1906 = scalar_lea.vmem %s5, %s1905
          // Predicated region
          $region45: #{convnet_forward.1} parent=43 // pred_check
            %p1907 = pneg %p1904
          $region46: #{convnet_forward.1} parent=43 // pred_check_branch
            %1909 = sbr.rel (%p1907) target = $region48
          $region47: #{convnet_forward.1} parent=43 // pred_region
            // Predicated region
            $region49: #{convnet_forward.1} parent=47 // pred_check
              _
            $region50: #{convnet_forward.1} parent=47 // pred_check_branch
              %1911 = sbr.rel (0) target = $region52
            $region51: #{convnet_forward.1} parent=47 // pred_region
              // Predicated region
              $region71: #{convnet_forward.1} parent=51 // pred_check
                _
              $region72: #{convnet_forward.1} parent=51 // pred_check_branch
                %2022 = sbr.rel (0) target = $region74
              $region73: #{convnet_forward.1} parent=51 // pred_region
                %s2023 = sshrl.u32 %s1902, 5
                // While loop
                $region75: #{convnet_forward.1} parent=73 // loop_pre_header
                  _
                $region76: #{convnet_forward.1} parent=73 // loop_header
                  %s2025 = sphi 0, %s2027
                  %p2026 = scmp.ge.s32.totalorder %s2025, %s2023
                  %s2030 = sphi 0, %s2099
                  %s2031 = sphi %s1895, %s2102
                  %s2032 = sphi %s1906, %s2103
                $region77: #{convnet_forward.1} parent=73 // loop_header_branch
                  %2029 = sbr.rel (%p2026) target = $region81
                $region78: #{convnet_forward.1} parent=73 // loop_body
                  %v2033 = vld [vmem:[%s2031] sm:$0xff]
                  %2034 = vst [vmem:[%s2032] sm:$0xff] %v2033
                  %v2035 = vld [vmem:[%s2031 + $0x8] sm:$0xff]
                  %2036 = vst [vmem:[%s2032 + $0x8] sm:$0xff] %v2035
                  %v2037 = vld [vmem:[%s2031 + $0x10] sm:$0xff]
                  %2038 = vst [vmem:[%s2032 + $0x10] sm:$0xff] %v2037
                  %v2039 = vld [vmem:[%s2031 + $0x18] sm:$0xff]
                  %2040 = vst [vmem:[%s2032 + $0x18] sm:$0xff] %v2039
                  %v2041 = vld [vmem:[%s2031 + $0x20] sm:$0xff]
                  %2042 = vst [vmem:[%s2032 + $0x20] sm:$0xff] %v2041
                  %v2043 = vld [vmem:[%s2031 + $0x28] sm:$0xff]
                  %2044 = vst [vmem:[%s2032 + $0x28] sm:$0xff] %v2043
                  %v2045 = vld [vmem:[%s2031 + $0x30] sm:$0xff]
                  %2046 = vst [vmem:[%s2032 + $0x30] sm:$0xff] %v2045
                  %v2047 = vld [vmem:[%s2031 + $0x38] sm:$0xff]
                  %2048 = vst [vmem:[%s2032 + $0x38] sm:$0xff] %v2047
                  %v2049 = vld [vmem:[%s2031 + $0x40] sm:$0xff]
                  %2050 = vst [vmem:[%s2032 + $0x40] sm:$0xff] %v2049
                  %v2051 = vld [vmem:[%s2031 + $0x48] sm:$0xff]
                  %2052 = vst [vmem:[%s2032 + $0x48] sm:$0xff] %v2051
                  %v2053 = vld [vmem:[%s2031 + $0x50] sm:$0xff]
                  %2054 = vst [vmem:[%s2032 + $0x50] sm:$0xff] %v2053
                  %v2055 = vld [vmem:[%s2031 + $0x58] sm:$0xff]
                  %2056 = vst [vmem:[%s2032 + $0x58] sm:$0xff] %v2055
                  %v2057 = vld [vmem:[%s2031 + $0x60] sm:$0xff]
                  %2058 = vst [vmem:[%s2032 + $0x60] sm:$0xff] %v2057
                  %v2059 = vld [vmem:[%s2031 + $0x68] sm:$0xff]
                  %2060 = vst [vmem:[%s2032 + $0x68] sm:$0xff] %v2059
                  %v2061 = vld [vmem:[%s2031 + $0x70] sm:$0xff]
                  %2062 = vst [vmem:[%s2032 + $0x70] sm:$0xff] %v2061
                  %v2063 = vld [vmem:[%s2031 + $0x78] sm:$0xff]
                  %2064 = vst [vmem:[%s2032 + $0x78] sm:$0xff] %v2063
                  %v2065 = vld [vmem:[%s2031 + $0x80] sm:$0xff]
                  %2066 = vst [vmem:[%s2032 + $0x80] sm:$0xff] %v2065
                  %v2067 = vld [vmem:[%s2031 + $0x88] sm:$0xff]
                  %2068 = vst [vmem:[%s2032 + $0x88] sm:$0xff] %v2067
                  %v2069 = vld [vmem:[%s2031 + $0x90] sm:$0xff]
                  %2070 = vst [vmem:[%s2032 + $0x90] sm:$0xff] %v2069
                  %v2071 = vld [vmem:[%s2031 + $0x98] sm:$0xff]
                  %2072 = vst [vmem:[%s2032 + $0x98] sm:$0xff] %v2071
                  %v2073 = vld [vmem:[%s2031 + $0xa0] sm:$0xff]
                  %2074 = vst [vmem:[%s2032 + $0xa0] sm:$0xff] %v2073
                  %v2075 = vld [vmem:[%s2031 + $0xa8] sm:$0xff]
                  %2076 = vst [vmem:[%s2032 + $0xa8] sm:$0xff] %v2075
                  %v2077 = vld [vmem:[%s2031 + $0xb0] sm:$0xff]
                  %2078 = vst [vmem:[%s2032 + $0xb0] sm:$0xff] %v2077
                  %v2079 = vld [vmem:[%s2031 + $0xb8] sm:$0xff]
                  %2080 = vst [vmem:[%s2032 + $0xb8] sm:$0xff] %v2079
                  %v2081 = vld [vmem:[%s2031 + $0xc0] sm:$0xff]
                  %2082 = vst [vmem:[%s2032 + $0xc0] sm:$0xff] %v2081
                  %v2083 = vld [vmem:[%s2031 + $0xc8] sm:$0xff]
                  %2084 = vst [vmem:[%s2032 + $0xc8] sm:$0xff] %v2083
                  %v2085 = vld [vmem:[%s2031 + $0xd0] sm:$0xff]
                  %2086 = vst [vmem:[%s2032 + $0xd0] sm:$0xff] %v2085
                  %v2087 = vld [vmem:[%s2031 + $0xd8] sm:$0xff]
                  %2088 = vst [vmem:[%s2032 + $0xd8] sm:$0xff] %v2087
                  %v2089 = vld [vmem:[%s2031 + $0xe0] sm:$0xff]
                  %2090 = vst [vmem:[%s2032 + $0xe0] sm:$0xff] %v2089
                  %v2091 = vld [vmem:[%s2031 + $0xe8] sm:$0xff]
                  %2092 = vst [vmem:[%s2032 + $0xe8] sm:$0xff] %v2091
                  %v2093 = vld [vmem:[%s2031 + $0xf0] sm:$0xff]
                  %2094 = vst [vmem:[%s2032 + $0xf0] sm:$0xff] %v2093
                  %v2095 = vld [vmem:[%s2031 + $0xf8] sm:$0xff]
                  %2096 = vst [vmem:[%s2032 + $0xf8] sm:$0xff] %v2095
                  %s2097 = sadd.s32 1, %s2030
                  %p2098 = scmp.ge.s32.totalorder %s2097, %s2023
                  %s2099 = scalar_select %p2098, 0, %s2097
                  %s2100 = smul.u32 %s2099, 256
                  %s2101 = smul.u32 %s2099, 256
                  %s2102 = scalar_lea.vmem %s1895, %s2100 [#allocation2]
                  %s2103 = scalar_lea.vmem %s1906, %s2101
                $region79: #{convnet_forward.1} parent=73 // loop_footer
                  %s2027 = sadd.s32 %s2025, 1
                $region80: #{convnet_forward.1} parent=73 // loop_footer_branch
                  %2024 = sbr.rel target = $region76
                $region81: #{convnet_forward.1} parent=73 // loop_exit
                  _
                %s2104 = sshrl.u32 %s1902, 5
                %s2105 = sand.u32 %s1902, 31
                %s2106 = smul.u32 %s2104, 32
                %s2107 = smul.u32 8, %s2106
                %s2108 = scalar_lea.vmem %s1895, %s2107 [#allocation2]
                %s2109 = smul.u32 8, %s2106
                %s2110 = scalar_lea.vmem %s1906, %s2109
                // While loop
                $region82: #{convnet_forward.1} parent=73 // loop_pre_header
                  _
                $region83: #{convnet_forward.1} parent=73 // loop_header
                  %s2112 = sphi 0, %s2114
                  %p2113 = scmp.ge.s32.totalorder %s2112, %s2105
                  %s2117 = sphi 0, %s2124
                  %s2118 = sphi %s2108, %s2127
                  %s2119 = sphi %s2110, %s2128
                $region84: #{convnet_forward.1} parent=73 // loop_header_branch
                  %2116 = sbr.rel (%p2113) target = $region88
                $region85: #{convnet_forward.1} parent=73 // loop_body
                  %v2120 = vld [vmem:[%s2118] sm:$0xff]
                  %2121 = vst [vmem:[%s2119] sm:$0xff] %v2120
                  %s2122 = sadd.s32 1, %s2117
                  %p2123 = scmp.ge.s32.totalorder %s2122, %s2105
                  %s2124 = scalar_select %p2123, 0, %s2122
                  %s2125 = smul.u32 %s2124, 8
                  %s2126 = smul.u32 %s2124, 8
                  %s2127 = scalar_lea.vmem %s2108, %s2125 [#allocation2]
                  %s2128 = scalar_lea.vmem %s2110, %s2126
                $region86: #{convnet_forward.1} parent=73 // loop_footer
                  %s2114 = sadd.s32 %s2112, 1
                $region87: #{convnet_forward.1} parent=73 // loop_footer_branch
                  %2111 = sbr.rel target = $region83
                $region88: #{convnet_forward.1} parent=73 // loop_exit
                  _
              $region74: #{convnet_forward.1} parent=51 // pred_fallthru
                _
              // Predicated region
              $region89: #{convnet_forward.1} parent=51 // pred_check
                _
              $region90: #{convnet_forward.1} parent=51 // pred_check_branch
                %2130 = sbr.rel target = $region92
              $region91: #{convnet_forward.1} parent=51 // pred_region
                _
              $region92: #{convnet_forward.1} parent=51 // pred_fallthru
                _
            $region52: #{convnet_forward.1} parent=47 // pred_fallthru
              _
            // Predicated region
            $region53: #{convnet_forward.1} parent=47 // pred_check
              _
            $region54: #{convnet_forward.1} parent=47 // pred_check_branch
              %1913 = sbr.rel target = $region56
            $region55: #{convnet_forward.1} parent=47 // pred_region
              %s1915 = sshrl.u32 %s1902, 5
              // While loop
              $region57: #{convnet_forward.1} parent=55 // loop_pre_header
                _
              $region58: #{convnet_forward.1} parent=55 // loop_header
                %s1917 = sphi 0, %s1919
                %p1918 = scmp.ge.s32.totalorder %s1917, %s1915
                %s1922 = sphi 0, %s1991
                %s1923 = sphi %s1895, %s1994
                %s1924 = sphi %s1906, %s1995
              $region59: #{convnet_forward.1} parent=55 // loop_header_branch
                %1921 = sbr.rel (%p1918) target = $region63
              $region60: #{convnet_forward.1} parent=55 // loop_body
                %v1925 = vld [vmem:[%s1923] sm:$0xff]
                %1926 = vst [vmem:[%s1924] sm:$0xff] %v1925
                %v1927 = vld [vmem:[%s1923 + $0x8] sm:$0xff]
                %1928 = vst [vmem:[%s1924 + $0x8] sm:$0xff] %v1927
                %v1929 = vld [vmem:[%s1923 + $0x10] sm:$0xff]
                %1930 = vst [vmem:[%s1924 + $0x10] sm:$0xff] %v1929
                %v1931 = vld [vmem:[%s1923 + $0x18] sm:$0xff]
                %1932 = vst [vmem:[%s1924 + $0x18] sm:$0xff] %v1931
                %v1933 = vld [vmem:[%s1923 + $0x20] sm:$0xff]
                %1934 = vst [vmem:[%s1924 + $0x20] sm:$0xff] %v1933
                %v1935 = vld [vmem:[%s1923 + $0x28] sm:$0xff]
                %1936 = vst [vmem:[%s1924 + $0x28] sm:$0xff] %v1935
                %v1937 = vld [vmem:[%s1923 + $0x30] sm:$0xff]
                %1938 = vst [vmem:[%s1924 + $0x30] sm:$0xff] %v1937
                %v1939 = vld [vmem:[%s1923 + $0x38] sm:$0xff]
                %1940 = vst [vmem:[%s1924 + $0x38] sm:$0xff] %v1939
                %v1941 = vld [vmem:[%s1923 + $0x40] sm:$0xff]
                %1942 = vst [vmem:[%s1924 + $0x40] sm:$0xff] %v1941
                %v1943 = vld [vmem:[%s1923 + $0x48] sm:$0xff]
                %1944 = vst [vmem:[%s1924 + $0x48] sm:$0xff] %v1943
                %v1945 = vld [vmem:[%s1923 + $0x50] sm:$0xff]
                %1946 = vst [vmem:[%s1924 + $0x50] sm:$0xff] %v1945
                %v1947 = vld [vmem:[%s1923 + $0x58] sm:$0xff]
                %1948 = vst [vmem:[%s1924 + $0x58] sm:$0xff] %v1947
                %v1949 = vld [vmem:[%s1923 + $0x60] sm:$0xff]
                %1950 = vst [vmem:[%s1924 + $0x60] sm:$0xff] %v1949
                %v1951 = vld [vmem:[%s1923 + $0x68] sm:$0xff]
                %1952 = vst [vmem:[%s1924 + $0x68] sm:$0xff] %v1951
                %v1953 = vld [vmem:[%s1923 + $0x70] sm:$0xff]
                %1954 = vst [vmem:[%s1924 + $0x70] sm:$0xff] %v1953
                %v1955 = vld [vmem:[%s1923 + $0x78] sm:$0xff]
                %1956 = vst [vmem:[%s1924 + $0x78] sm:$0xff] %v1955
                %v1957 = vld [vmem:[%s1923 + $0x80] sm:$0xff]
                %1958 = vst [vmem:[%s1924 + $0x80] sm:$0xff] %v1957
                %v1959 = vld [vmem:[%s1923 + $0x88] sm:$0xff]
                %1960 = vst [vmem:[%s1924 + $0x88] sm:$0xff] %v1959
                %v1961 = vld [vmem:[%s1923 + $0x90] sm:$0xff]
                %1962 = vst [vmem:[%s1924 + $0x90] sm:$0xff] %v1961
                %v1963 = vld [vmem:[%s1923 + $0x98] sm:$0xff]
                %1964 = vst [vmem:[%s1924 + $0x98] sm:$0xff] %v1963
                %v1965 = vld [vmem:[%s1923 + $0xa0] sm:$0xff]
                %1966 = vst [vmem:[%s1924 + $0xa0] sm:$0xff] %v1965
                %v1967 = vld [vmem:[%s1923 + $0xa8] sm:$0xff]
                %1968 = vst [vmem:[%s1924 + $0xa8] sm:$0xff] %v1967
                %v1969 = vld [vmem:[%s1923 + $0xb0] sm:$0xff]
                %1970 = vst [vmem:[%s1924 + $0xb0] sm:$0xff] %v1969
                %v1971 = vld [vmem:[%s1923 + $0xb8] sm:$0xff]
                %1972 = vst [vmem:[%s1924 + $0xb8] sm:$0xff] %v1971
                %v1973 = vld [vmem:[%s1923 + $0xc0] sm:$0xff]
                %1974 = vst [vmem:[%s1924 + $0xc0] sm:$0xff] %v1973
                %v1975 = vld [vmem:[%s1923 + $0xc8] sm:$0xff]
                %1976 = vst [vmem:[%s1924 + $0xc8] sm:$0xff] %v1975
                %v1977 = vld [vmem:[%s1923 + $0xd0] sm:$0xff]
                %1978 = vst [vmem:[%s1924 + $0xd0] sm:$0xff] %v1977
                %v1979 = vld [vmem:[%s1923 + $0xd8] sm:$0xff]
                %1980 = vst [vmem:[%s1924 + $0xd8] sm:$0xff] %v1979
                %v1981 = vld [vmem:[%s1923 + $0xe0] sm:$0xff]
                %1982 = vst [vmem:[%s1924 + $0xe0] sm:$0xff] %v1981
                %v1983 = vld [vmem:[%s1923 + $0xe8] sm:$0xff]
                %1984 = vst [vmem:[%s1924 + $0xe8] sm:$0xff] %v1983
                %v1985 = vld [vmem:[%s1923 + $0xf0] sm:$0xff]
                %1986 = vst [vmem:[%s1924 + $0xf0] sm:$0xff] %v1985
                %v1987 = vld [vmem:[%s1923 + $0xf8] sm:$0xff]
                %1988 = vst [vmem:[%s1924 + $0xf8] sm:$0xff] %v1987
                %s1989 = sadd.s32 1, %s1922
                %p1990 = scmp.ge.s32.totalorder %s1989, %s1915
                %s1991 = scalar_select %p1990, 0, %s1989
                %s1992 = smul.u32 %s1991, 256
                %s1993 = smul.u32 %s1991, 256
                %s1994 = scalar_lea.vmem %s1895, %s1992 [#allocation2]
                %s1995 = scalar_lea.vmem %s1906, %s1993
              $region61: #{convnet_forward.1} parent=55 // loop_footer
                %s1919 = sadd.s32 %s1917, 1
              $region62: #{convnet_forward.1} parent=55 // loop_footer_branch
                %1916 = sbr.rel target = $region58
              $region63: #{convnet_forward.1} parent=55 // loop_exit
                _
              %s1996 = sshrl.u32 %s1902, 5
              %s1997 = sand.u32 %s1902, 31
              %s1998 = smul.u32 %s1996, 32
              %s1999 = smul.u32 8, %s1998
              %s2000 = scalar_lea.vmem %s1895, %s1999 [#allocation2]
              %s2001 = smul.u32 8, %s1998
              %s2002 = scalar_lea.vmem %s1906, %s2001
              // While loop
              $region64: #{convnet_forward.1} parent=55 // loop_pre_header
                _
              $region65: #{convnet_forward.1} parent=55 // loop_header
                %s2004 = sphi 0, %s2006
                %p2005 = scmp.ge.s32.totalorder %s2004, %s1997
                %s2009 = sphi 0, %s2016
                %s2010 = sphi %s2000, %s2019
                %s2011 = sphi %s2002, %s2020
              $region66: #{convnet_forward.1} parent=55 // loop_header_branch
                %2008 = sbr.rel (%p2005) target = $region70
              $region67: #{convnet_forward.1} parent=55 // loop_body
                %v2012 = vld [vmem:[%s2010] sm:$0xff]
                %2013 = vst [vmem:[%s2011] sm:$0xff] %v2012
                %s2014 = sadd.s32 1, %s2009
                %p2015 = scmp.ge.s32.totalorder %s2014, %s1997
                %s2016 = scalar_select %p2015, 0, %s2014
                %s2017 = smul.u32 %s2016, 8
                %s2018 = smul.u32 %s2016, 8
                %s2019 = scalar_lea.vmem %s2000, %s2017 [#allocation2]
                %s2020 = scalar_lea.vmem %s2002, %s2018
              $region68: #{convnet_forward.1} parent=55 // loop_footer
                %s2006 = sadd.s32 %s2004, 1
              $region69: #{convnet_forward.1} parent=55 // loop_footer_branch
                %2003 = sbr.rel target = $region65
              $region70: #{convnet_forward.1} parent=55 // loop_exit
                _
            $region56: #{convnet_forward.1} parent=47 // pred_fallthru
              _
          $region48: #{convnet_forward.1} parent=43 // pred_fallthru
            _
          %2131 = vnop
        $region44: #{convnet_forward.1} parent=39 // pred_fallthru
          _
      $region40: #{convnet_forward.1} parent=5 // pred_fallthru
        _
      %p2132 = scmp.le.s32.totalorder 2, %s11
      // Predicated region
      $region93: #{convnet_forward.1} parent=5 // pred_check
        %p2133 = pneg %p2132
      $region94: #{convnet_forward.1} parent=5 // pred_check_branch
        %2135 = sbr.rel (%p2133) target = $region96
      $region95: #{convnet_forward.1} parent=5 // pred_region
        %s2136 = ssub.s32 %s11, 2
        // Predicated region
        $region97: #{convnet_forward.1} parent=95 // pred_check
          %p2137 = pneg %p150
        $region98: #{convnet_forward.1} parent=95 // pred_check_branch
          %2139 = sbr.rel (%p2137) target = $region100
        $region99: #{convnet_forward.1} parent=95 // pred_region
          %s2140 = sand.u32 %s135, 1
          %s2141 = sand.u32 %s135, 1
          %s2142 = smul.addr %s2141, 256
          %s2143 = scalar_lea.vmem [#allocation2], %s2142
        $region100: #{convnet_forward.1} parent=95 // pred_fallthru
          _
      $region96: #{convnet_forward.1} parent=5 // pred_fallthru
        _
    $region6: #{convnet_forward.1} parent=1 // loop_footer
      %s15 = sadd.s32 1, %s11
    $region7: #{convnet_forward.1} parent=1 // loop_footer_branch
      %10 = sbr.rel target = $region3
    $region8: #{convnet_forward.1} parent=1 // loop_exit
      _

</llo_original>
